<compile_context>
chip_gen: v5e
topology: v5e:2x2
jax: 0.10.0
libtpu: 0.0.40
codegen_flags: <defaults>
</compile_context>

<pallas_src>
import functools

import numpy as np
import jax
import jax.numpy as jnp
from jax.experimental import pallas as pl
from jax.experimental.pallas import tpu as pltpu


def _round_up(n, m):
    return ((n + m - 1) // m) * m


def _tap_offsets_and_masks(H, W):
    """Flat-index offsets and validity masks for the 9 taps of a 3x3 'same' conv."""
    HW = H * W
    pos = np.arange(HW)
    row, col = pos // W, pos % W
    offsets, masks = [], []
    for dy in (-1, 0, 1):
        for dx in (-1, 0, 1):
            offsets.append(dy * W + dx)
            valid = ((row + dy >= 0) & (row + dy < H) &
                     (col + dx >= 0) & (col + dx < W))
            masks.append(valid.astype(np.float32))
    return tuple(offsets), np.stack(masks, axis=0)  # (9,), (9, HW)


# ----------------------------------------------------------------------------------
# Fused Pallas kernel: one packed layer chain (all heads), one batch element per step
# ----------------------------------------------------------------------------------
def _separate_head_kernel(*refs, num_layers, tap_offsets, HW):
    """refs = [x, tap_masks, (W, b) per packed layer ..., out, patch scratch(es)]

    x:       (Cpad, HW)      channel-padded, spatially-flattened input (lanes = HW), f32
    masks:   (9, HW)         per-tap boundary validity masks, f32
    W:       (M, 9*Kin)      bf16, BN-folded, head-stacked / block-diagonal packed weight
    b:       (M, 1)          f32 bias (BN shift for intermediate layers)
    out:     (Mpad, HW)      all heads' output channels stacked (lane-dense store)
    patch_*: VMEM scratch    bf16 im2col patch buffers (one for x, one reused for slabs)
    """
    x_ref, masks_ref = refs[0], refs[1]
    w_refs = refs[2:2 + 2 * num_layers:2]
    b_refs = refs[3:2 + 2 * num_layers:2]
    out_ref = refs[2 + 2 * num_layers]
    patch_refs = refs[3 + 2 * num_layers:]

    masks = masks_ref[...]                                   # (9, HW) f32

    def im2col(feat, patch_ref):
        """Write the 9 taps of `feat` (Cin, HW) into patch_ref (9*Cin, HW) as bf16."""
        cin = feat.shape[0]
        for t, off in enumerate(tap_offsets):
            # shifted[:, p] == feat[:, p + off]; wrap-around is zeroed by the mask.
            tap = feat if off == 0 else pltpu.roll(feat, shift=(-off) % HW, axis=1)
            if t != 4:                                       # center tap mask is all-ones
                tap = tap * masks[t:t + 1, :]
            patch_ref[t * cin:(t + 1) * cin, :] = tap.astype(patch_ref.dtype)

    act = x_ref[...]                                         # (Cpad, HW) f32
    for li in range(num_layers):
        pref = patch_refs[min(li, len(patch_refs) - 1)]
        im2col(act, pref)                                    # patch materialized once, in VMEM scratch
        w = w_refs[li][...]                                  # (M, 9*Kin) bf16
        b = b_refs[li][...]                                  # (M, 1)     f32
        y = jax.lax.dot_general(                             # bf16 x bf16 -> f32 acc on MXU
            w, pref[...],
            dimension_numbers=(((1,), (0,)), ((), ())),
            preferred_element_type=jnp.float32) + b          # (M, HW), lane-dense
        if li < num_layers - 1:                              # Conv + (folded) BN + ReLU
            act = jnp.maximum(y, 0.0)
        else:
            out_ref[...] = y.astype(out_ref.dtype)


# ----------------------------------------------------------------------------------
# Parameter packing: fold BN, pad channels to 16, stack heads, go bf16
# ----------------------------------------------------------------------------------
def _w_to_mat_np(w, scale, ci_pad, co_pad):
    """(3,3,Ci,Co) HWIO + BN scale -> (co_pad, 9*ci_pad), columns tap-major then channel."""
    w = np.asarray(w, np.float32) * np.asarray(scale, np.float32).reshape(1, 1, 1, -1)
    ci, co = w.shape[2], w.shape[3]
    w = np.pad(w, ((0, 0), (0, 0), (0, ci_pad - ci), (0, co_pad - co)))
    return np.transpose(w.reshape(9 * ci_pad, co_pad))


def pack_separate_head_params(params, input_channels):
    head_names = list(params.keys())
    NH = len(head_names)
    layer_counts = {len(params[n]) for n in head_names}
    assert len(layer_counts) == 1, "head-stacked packing assumes equal num_conv per head"
    L = layer_counts.pop()

    C = input_channels
    Cpad = _round_up(C, 16)                 # bf16 sublane packing -> multiple of 16
    Cslab = NH * Cpad

    head_out_c = [int(np.asarray(params[n][-1]['w']).shape[3]) for n in head_names]
    offs = np.cumsum([0] + head_out_c)
    Mout = int(offs[-1])
    Mpad = _round_up(Mout, 16)

    flat = []
    # intermediate layers (Conv C->C + folded BN + ReLU)
    for li in range(L - 1):
        if li == 0:
            # shared input x: dense stacking along the output-channel axis
            W = np.concatenate(
                [_w_to_mat_np(params[n][0]['w'], params[n][0]['scale'], Cpad, Cpad)
                 for n in head_names], axis=0)                       # (Cslab, 9*Cpad)
        else:
            # per-head hidden slabs: block-diagonal over the stacked channel axis
            W = np.zeros((Cslab, 9 * Cslab), np.float32)
            for h, n in enumerate(head_names):
                mat = _w_to_mat_np(params[n][li]['w'], params[n][li]['scale'], Cpad, Cpad)
                for t in range(9):
                    W[h * Cpad:(h + 1) * Cpad,
                      t * Cslab + h * Cpad:t * Cslab + (h + 1) * Cpad] = \
                        mat[:, t * Cpad:(t + 1) * Cpad]
        b = np.zeros((Cslab, 1), np.float32)
        for h, n in enumerate(head_names):
            bh = np.asarray(params[n][li]['bias'], np.float32)
            b[h * Cpad:h * Cpad + bh.shape[0], 0] = bh
        flat += [jnp.asarray(W, jnp.bfloat16), jnp.asarray(b)]

    # fused final conv (block-diagonal over heads if there is a hidden slab)
    Kin = Cpad if L == 1 else Cslab
    W = np.zeros((Mpad, 9 * Kin), np.float32)
    b = np.zeros((Mpad, 1), np.float32)
    for h, n in enumerate(head_names):
        co = head_out_c[h]
        mat = _w_to_mat_np(params[n][L - 1]['w'], params[n][L - 1]['scale'], Cpad, co)
        if L == 1:
            W[offs[h]:offs[h] + co, :] = mat
        else:
            for t in range(9):
                W[offs[h]:offs[h] + co,
                  t * Cslab + h * Cpad:t * Cslab + (h + 1) * Cpad] = \
                    mat[:, t * Cpad:(t + 1) * Cpad]
        b[offs[h]:offs[h] + co, 0] = np.asarray(params[n][L - 1]['bias'], np.float32)
    flat += [jnp.asarray(W, jnp.bfloat16), jnp.asarray(b)]

    meta = dict(head_names=head_names, head_out_c=head_out_c,
                head_offsets=[int(o) for o in offs[:-1]],
                num_layers=L, Cpad=Cpad, Cslab=Cslab, Mpad=Mpad)
    return flat, meta


# ----------------------------------------------------------------------------------
# Wrapper
# ----------------------------------------------------------------------------------
def separate_head_forward(params, x_nchw):
    """Returns dict name -> NCHW output, matching SeparateHead.forward."""
    B, C, H, W = x_nchw.shape
    HW = H * W

    flat_params, meta = pack_separate_head_params(params, C)
    Cpad, Cslab = meta['Cpad'], meta['Cslab']
    L, Mpad = meta['num_layers'], meta['Mpad']

    tap_offsets, masks_np = _tap_offsets_and_masks(H, W)
    masks = jnp.asarray(masks_np)

    # NCHW -> (B, Cpad, H*W): metadata-only reshape + zero channel pad (no transpose).
    x = x_nchw.reshape(B, C, HW)
    if Cpad != C:
        x = jnp.pad(x, ((0, 0), (0, Cpad - C), (0, 0)))

    kernel = functools.partial(
        _separate_head_kernel,
        num_layers=L, tap_offsets=tap_offsets, HW=HW)

    in_specs = [pl.BlockSpec((pl.Squeezed(), Cpad, HW), lambda b: (b, 0, 0)),
                pl.BlockSpec(masks.shape, lambda b: (0, 0))]
    for p in flat_params:
        in_specs.append(pl.BlockSpec(p.shape, lambda b: (0, 0)))

    out_specs = pl.BlockSpec((pl.Squeezed(), Mpad, HW), lambda b: (b, 0, 0))
    out_shape = jax.ShapeDtypeStruct((B, Mpad, HW), x_nchw.dtype)

    scratch_shapes = [pltpu.VMEM((9 * Cpad, HW), jnp.bfloat16)]      # patch of x
    if L >= 2:
        scratch_shapes.append(pltpu.VMEM((9 * Cslab, HW), jnp.bfloat16))  # reused slab patch

    out = pl.pallas_call(
        kernel,
        grid=(B,),
        in_specs=in_specs,
        out_specs=out_specs,
        out_shape=out_shape,
        scratch_shapes=scratch_shapes,
        compiler_params=pltpu.CompilerParams(
            dimension_semantics=("parallel",),            # batch shards across v7x TCs
            vmem_limit_bytes=32 * 1024 * 1024),           # above default scoped limit
    )(x, masks, *flat_params)

    ret = {}
    for name, off, co in zip(meta['head_names'], meta['head_offsets'], meta['head_out_c']):
        ret[name] = out[:, off:off + co, :].reshape(B, co, H, W)
    return ret


# ----------------------------------------------------------------------------------
# Parameter construction (deterministic, mirrors SeparateHead.__init__ semantics)
# ----------------------------------------------------------------------------------
def init_separate_head_params(key, input_channels, sep_head_dict,
                              init_bias=-2.19, use_bias=False):
    del use_bias  # intermediate convs have no bias in the reference module
    params = {}
    bn_eps = 1e-5
    for name, cfg in sep_head_dict.items():
        out_c = cfg['out_channels']
        num_conv = cfg['num_conv']
        layers = []
        # (num_conv - 1) x [Conv3x3 no-bias + BN + ReLU]
        for _ in range(num_conv - 1):
            key, wk = jax.random.split(key)
            fan_in = 9 * input_channels
            w = jax.random.normal(
                wk, (3, 3, input_channels, input_channels), jnp.float32
            ) * jnp.sqrt(2.0 / fan_in)                        # kaiming_normal_
            gamma = jnp.ones((input_channels,), jnp.float32)  # BN at init (eval mode)
            beta = jnp.zeros((input_channels,), jnp.float32)
            run_mean = jnp.zeros((input_channels,), jnp.float32)
            run_var = jnp.ones((input_channels,), jnp.float32)
            scale = gamma / jnp.sqrt(run_var + bn_eps)
            shift = beta - run_mean * scale
            layers.append(dict(w=w, scale=scale, bias=shift, relu=True))
        # final Conv3x3 with bias
        key, wk = jax.random.split(key)
        fan_in = 9 * input_channels
        w = jax.random.normal(
            wk, (3, 3, input_channels, out_c), jnp.float32
        ) * jnp.sqrt(2.0 / fan_in)
        b = jnp.full((out_c,), init_bias if 'hm' in name else 0.0, jnp.float32)
        layers.append(dict(w=w, scale=jnp.ones((out_c,), jnp.float32),
                           bias=b, relu=False))
        params[name] = layers
    return params


# ----------------------------------------------------------------------------------
# Pure-JAX reference (lax conv), mirroring the kernel's bf16 operand rounding
# ----------------------------------------------------------------------------------
def _ref_forward(params, x_nchw, compute_dtype=jnp.bfloat16):
    x = jnp.transpose(x_nchw, (0, 2, 3, 1))
    ret = {}
    for name, layers in params.items():
        h = x
        for layer in layers:
            w = layer['w'] * layer['scale'].reshape(1, 1, 1, -1)      # fold BN scale
            w = w.astype(compute_dtype).astype(jnp.float32)           # bf16 operand rounding
            h_c = h.astype(compute_dtype).astype(jnp.float32)
            h = jax.lax.conv_general_dilated(
                h_c, w, window_strides=(1, 1), padding='SAME',
                dimension_numbers=('NHWC', 'HWIO', 'NHWC'),
                preferred_element_type=jnp.float32,
                precision=jax.lax.Precision.HIGHEST)
            h = h + layer['bias']
            if layer['relu']:
                h = jnp.maximum(h, 0.0)
        ret[name] = jnp.transpose(h, (0, 3, 1, 2))
    return ret


if __name__ == "__main__":
    SEP_HEAD_DICT = {
        'center':   {'out_channels': 2, 'num_conv': 2},
        'center_z': {'out_channels': 1, 'num_conv': 2},
        'dim':      {'out_channels': 3, 'num_conv': 2},
        'hm':       {'out_channels': 3, 'num_conv': 2},
        'rot':      {'out_channels': 2, 'num_conv': 2},
    }
    B, C, H, W = 2, 4, 16, 16

    key = jax.random.PRNGKey(0)
    key, pkey, xkey = jax.random.split(key, 3)
    params = init_separate_head_params(pkey, C, SEP_HEAD_DICT, init_bias=-2.19)
    x = jax.random.normal(xkey, (B, C, H, W), jnp.float32)

    out = separate_head_forward(params, x)
    out = jax.tree_util.tree_map(jax.block_until_ready, out)

    ref = _ref_forward(params, x)
    for name in SEP_HEAD_DICT:
        exp_c = SEP_HEAD_DICT[name]['out_channels']
        assert out[name].shape == (B, exp_c, H, W), (name, out[name].shape)
        assert jnp.allclose(out[name], ref[name], atol=2e-3, rtol=2e-3), name

    print("KERNEL_OK")
</pallas_src>

<mosaic_0001>
module attributes {stable_mosaic.version = 11 : i64} {
  func.func @_separate_head_kernel(%arg0: i32, %arg1: memref<1x16x256xf32, #tpu.memory_space<vmem>>, %arg2: memref<9x256xf32, #tpu.memory_space<vmem>>, %arg3: memref<80x144xbf16, #tpu.memory_space<vmem>>, %arg4: memref<80x1xf32, #tpu.memory_space<vmem>>, %arg5: memref<16x720xbf16, #tpu.memory_space<vmem>>, %arg6: memref<16x1xf32, #tpu.memory_space<vmem>>, %arg7: memref<1x16x256xf32, #tpu.memory_space<vmem>>, %arg8: memref<144x256xbf16, #tpu.memory_space<vmem>>, %arg9: memref<720x256xbf16, #tpu.memory_space<vmem>>) attributes {dimension_semantics = [#tpu.dimension_semantics<parallel>], iteration_bounds = array<i64: 2>, scalar_prefetch = 0 : i64, scratch_operands = 2 : i64, tpu.core_type = #tpu.core_type<tc>, window_params = [{transform_indices = @transform_0, window_bounds = array<i64: 1, 16, 256>}, {pipeline_mode = #tpu.pipeline_mode<synchronous>, transform_indices = @transform_1, window_bounds = array<i64: 9, 256>}, {pipeline_mode = #tpu.pipeline_mode<synchronous>, transform_indices = @transform_2, window_bounds = array<i64: 80, 144>}, {pipeline_mode = #tpu.pipeline_mode<synchronous>, transform_indices = @transform_3, window_bounds = array<i64: 80, 1>}, {pipeline_mode = #tpu.pipeline_mode<synchronous>, transform_indices = @transform_4, window_bounds = array<i64: 16, 720>}, {pipeline_mode = #tpu.pipeline_mode<synchronous>, transform_indices = @transform_5, window_bounds = array<i64: 16, 1>}, {transform_indices = @transform_6, window_bounds = array<i64: 1, 16, 256>}]} {
    %c0 = arith.constant 0 : index
    %c0_0 = arith.constant 0 : index
    %0 = vector.load %arg2[%c0, %c0_0] : memref<9x256xf32, #tpu.memory_space<vmem>>, vector<9x256xf32>
    %c0_1 = arith.constant 0 : index
    %c0_2 = arith.constant 0 : index
    %c0_3 = arith.constant 0 : index
    %1 = vector.load %arg1[%c0_1, %c0_2, %c0_3] : memref<1x16x256xf32, #tpu.memory_space<vmem>>, vector<1x16x256xf32>
    %2 = vector.shape_cast %1 : vector<1x16x256xf32> to vector<16x256xf32>
    %c17_i32 = arith.constant 17 : i32
    %3 = tpu.dynamic_rotate %2 by %c17_i32 dim 1 : vector<16x256xf32>, i32 -> vector<16x256xf32>
    %4 = vector.extract_strided_slice %0 {offsets = [0, 0], sizes = [1, 256], strides = [1, 1]} : vector<9x256xf32> to vector<1x256xf32>
    %5 = vector.broadcast %4 : vector<1x256xf32> to vector<16x256xf32>
    %6 = arith.mulf %3, %5 : vector<16x256xf32>
    %7 = arith.truncf %6 : vector<16x256xf32> to vector<16x256xbf16>
    %c0_4 = arith.constant 0 : index
    %c0_5 = arith.constant 0 : index
    %8 = vector.load %arg8[%c0_4, %c0_5] : memref<144x256xbf16, #tpu.memory_space<vmem>>, vector<16x256xbf16>
    tpu.vector_store %arg8[%c0_4, %c0_5], %7 {strides = array<i32>} : memref<144x256xbf16, #tpu.memory_space<vmem>>, vector<16x256xbf16>,
    %c16_i32 = arith.constant 16 : i32
    %9 = tpu.dynamic_rotate %2 by %c16_i32 dim 1 : vector<16x256xf32>, i32 -> vector<16x256xf32>
    %10 = vector.extract_strided_slice %0 {offsets = [1, 0], sizes = [1, 256], strides = [1, 1]} : vector<9x256xf32> to vector<1x256xf32>
    %11 = vector.broadcast %10 : vector<1x256xf32> to vector<16x256xf32>
    %12 = arith.mulf %9, %11 : vector<16x256xf32>
    %13 = arith.truncf %12 : vector<16x256xf32> to vector<16x256xbf16>
    %c16 = arith.constant 16 : index
    %c0_6 = arith.constant 0 : index
    %14 = vector.load %arg8[%c16, %c0_6] : memref<144x256xbf16, #tpu.memory_space<vmem>>, vector<16x256xbf16>
    tpu.vector_store %arg8[%c16, %c0_6], %13 {strides = array<i32>} : memref<144x256xbf16, #tpu.memory_space<vmem>>, vector<16x256xbf16>,
    %c15_i32 = arith.constant 15 : i32
    %15 = tpu.dynamic_rotate %2 by %c15_i32 dim 1 : vector<16x256xf32>, i32 -> vector<16x256xf32>
    %16 = vector.extract_strided_slice %0 {offsets = [2, 0], sizes = [1, 256], strides = [1, 1]} : vector<9x256xf32> to vector<1x256xf32>
    %17 = vector.broadcast %16 : vector<1x256xf32> to vector<16x256xf32>
    %18 = arith.mulf %15, %17 : vector<16x256xf32>
    %19 = arith.truncf %18 : vector<16x256xf32> to vector<16x256xbf16>
    %c32 = arith.constant 32 : index
    %c0_7 = arith.constant 0 : index
    %20 = vector.load %arg8[%c32, %c0_7] : memref<144x256xbf16, #tpu.memory_space<vmem>>, vector<16x256xbf16>
    tpu.vector_store %arg8[%c32, %c0_7], %19 {strides = array<i32>} : memref<144x256xbf16, #tpu.memory_space<vmem>>, vector<16x256xbf16>,
    %c1_i32 = arith.constant 1 : i32
    %21 = tpu.dynamic_rotate %2 by %c1_i32 dim 1 : vector<16x256xf32>, i32 -> vector<16x256xf32>
    %22 = vector.extract_strided_slice %0 {offsets = [3, 0], sizes = [1, 256], strides = [1, 1]} : vector<9x256xf32> to vector<1x256xf32>
    %23 = vector.broadcast %22 : vector<1x256xf32> to vector<16x256xf32>
    %24 = arith.mulf %21, %23 : vector<16x256xf32>
    %25 = arith.truncf %24 : vector<16x256xf32> to vector<16x256xbf16>
    %c48 = arith.constant 48 : index
    %c0_8 = arith.constant 0 : index
    %26 = vector.load %arg8[%c48, %c0_8] : memref<144x256xbf16, #tpu.memory_space<vmem>>, vector<16x256xbf16>
    tpu.vector_store %arg8[%c48, %c0_8], %25 {strides = array<i32>} : memref<144x256xbf16, #tpu.memory_space<vmem>>, vector<16x256xbf16>,
    %27 = arith.truncf %2 : vector<16x256xf32> to vector<16x256xbf16>
    %c64 = arith.constant 64 : index
    %c0_9 = arith.constant 0 : index
    %28 = vector.load %arg8[%c64, %c0_9] : memref<144x256xbf16, #tpu.memory_space<vmem>>, vector<16x256xbf16>
    tpu.vector_store %arg8[%c64, %c0_9], %27 {strides = array<i32>} : memref<144x256xbf16, #tpu.memory_space<vmem>>, vector<16x256xbf16>,
    %c255_i32 = arith.constant 255 : i32
    %29 = tpu.dynamic_rotate %2 by %c255_i32 dim 1 : vector<16x256xf32>, i32 -> vector<16x256xf32>
    %30 = vector.extract_strided_slice %0 {offsets = [5, 0], sizes = [1, 256], strides = [1, 1]} : vector<9x256xf32> to vector<1x256xf32>
    %31 = vector.broadcast %30 : vector<1x256xf32> to vector<16x256xf32>
    %32 = arith.mulf %29, %31 : vector<16x256xf32>
    %33 = arith.truncf %32 : vector<16x256xf32> to vector<16x256xbf16>
    %c80 = arith.constant 80 : index
    %c0_10 = arith.constant 0 : index
    %34 = vector.load %arg8[%c80, %c0_10] : memref<144x256xbf16, #tpu.memory_space<vmem>>, vector<16x256xbf16>
    tpu.vector_store %arg8[%c80, %c0_10], %33 {strides = array<i32>} : memref<144x256xbf16, #tpu.memory_space<vmem>>, vector<16x256xbf16>,
    %c241_i32 = arith.constant 241 : i32
    %35 = tpu.dynamic_rotate %2 by %c241_i32 dim 1 : vector<16x256xf32>, i32 -> vector<16x256xf32>
    %36 = vector.extract_strided_slice %0 {offsets = [6, 0], sizes = [1, 256], strides = [1, 1]} : vector<9x256xf32> to vector<1x256xf32>
    %37 = vector.broadcast %36 : vector<1x256xf32> to vector<16x256xf32>
    %38 = arith.mulf %35, %37 : vector<16x256xf32>
    %39 = arith.truncf %38 : vector<16x256xf32> to vector<16x256xbf16>
    %c96 = arith.constant 96 : index
    %c0_11 = arith.constant 0 : index
    %40 = vector.load %arg8[%c96, %c0_11] : memref<144x256xbf16, #tpu.memory_space<vmem>>, vector<16x256xbf16>
    tpu.vector_store %arg8[%c96, %c0_11], %39 {strides = array<i32>} : memref<144x256xbf16, #tpu.memory_space<vmem>>, vector<16x256xbf16>,
    %c240_i32 = arith.constant 240 : i32
    %41 = tpu.dynamic_rotate %2 by %c240_i32 dim 1 : vector<16x256xf32>, i32 -> vector<16x256xf32>
    %42 = vector.extract_strided_slice %0 {offsets = [7, 0], sizes = [1, 256], strides = [1, 1]} : vector<9x256xf32> to vector<1x256xf32>
    %43 = vector.broadcast %42 : vector<1x256xf32> to vector<16x256xf32>
    %44 = arith.mulf %41, %43 : vector<16x256xf32>
    %45 = arith.truncf %44 : vector<16x256xf32> to vector<16x256xbf16>
    %c112 = arith.constant 112 : index
    %c0_12 = arith.constant 0 : index
    %46 = vector.load %arg8[%c112, %c0_12] : memref<144x256xbf16, #tpu.memory_space<vmem>>, vector<16x256xbf16>
    tpu.vector_store %arg8[%c112, %c0_12], %45 {strides = array<i32>} : memref<144x256xbf16, #tpu.memory_space<vmem>>, vector<16x256xbf16>,
    %c239_i32 = arith.constant 239 : i32
    %47 = tpu.dynamic_rotate %2 by %c239_i32 dim 1 : vector<16x256xf32>, i32 -> vector<16x256xf32>
    %48 = vector.extract_strided_slice %0 {offsets = [8, 0], sizes = [1, 256], strides = [1, 1]} : vector<9x256xf32> to vector<1x256xf32>
    %49 = vector.broadcast %48 : vector<1x256xf32> to vector<16x256xf32>
    %50 = arith.mulf %47, %49 : vector<16x256xf32>
    %51 = arith.truncf %50 : vector<16x256xf32> to vector<16x256xbf16>
    %c128 = arith.constant 128 : index
    %c0_13 = arith.constant 0 : index
    %52 = vector.load %arg8[%c128, %c0_13] : memref<144x256xbf16, #tpu.memory_space<vmem>>, vector<16x256xbf16>
    tpu.vector_store %arg8[%c128, %c0_13], %51 {strides = array<i32>} : memref<144x256xbf16, #tpu.memory_space<vmem>>, vector<16x256xbf16>,
    %c0_14 = arith.constant 0 : index
    %c0_15 = arith.constant 0 : index
    %53 = vector.load %arg3[%c0_14, %c0_15] : memref<80x144xbf16, #tpu.memory_space<vmem>>, vector<80x144xbf16>
    %c0_16 = arith.constant 0 : index
    %c0_17 = arith.constant 0 : index
    %54 = vector.load %arg4[%c0_16, %c0_17] : memref<80x1xf32, #tpu.memory_space<vmem>>, vector<80x1xf32>
    %c0_18 = arith.constant 0 : index
    %c0_19 = arith.constant 0 : index
    %55 = vector.load %arg8[%c0_18, %c0_19] : memref<144x256xbf16, #tpu.memory_space<vmem>>, vector<144x256xbf16>
    %cst = arith.constant dense<0.000000e+00> : vector<80x256xf32>
    %56 = tpu.matmul %53, %55, %cst {dimension_numbers = #tpu.dot_dimension_numbers<[1], [0], [0], [1], [0, 0, 1, 1], [], []>} : vector<80x144xbf16>, vector<144x256xbf16>, vector<80x256xf32> -> vector<80x256xf32>
    %57 = vector.broadcast %54 : vector<80x1xf32> to vector<80x256xf32>
    %58 = arith.addf %56, %57 : vector<80x256xf32>
    %cst_20 = arith.constant 0.000000e+00 : f32
    %59 = vector.broadcast %cst_20 : f32 to vector<80x256xf32>
    %60 = arith.maximumf %58, %59 : vector<80x256xf32>
    %c17_i32_21 = arith.constant 17 : i32
    %61 = tpu.dynamic_rotate %60 by %c17_i32_21 dim 1 : vector<80x256xf32>, i32 -> vector<80x256xf32>
    %62 = vector.extract_strided_slice %0 {offsets = [0, 0], sizes = [1, 256], strides = [1, 1]} : vector<9x256xf32> to vector<1x256xf32>
    %63 = vector.broadcast %62 : vector<1x256xf32> to vector<80x256xf32>
    %64 = arith.mulf %61, %63 : vector<80x256xf32>
    %65 = arith.truncf %64 : vector<80x256xf32> to vector<80x256xbf16>
    %c0_22 = arith.constant 0 : index
    %c0_23 = arith.constant 0 : index
    %66 = vector.load %arg9[%c0_22, %c0_23] : memref<720x256xbf16, #tpu.memory_space<vmem>>, vector<80x256xbf16>
    tpu.vector_store %arg9[%c0_22, %c0_23], %65 {strides = array<i32>} : memref<720x256xbf16, #tpu.memory_space<vmem>>, vector<80x256xbf16>,
    %c16_i32_24 = arith.constant 16 : i32
    %67 = tpu.dynamic_rotate %60 by %c16_i32_24 dim 1 : vector<80x256xf32>, i32 -> vector<80x256xf32>
    %68 = vector.extract_strided_slice %0 {offsets = [1, 0], sizes = [1, 256], strides = [1, 1]} : vector<9x256xf32> to vector<1x256xf32>
    %69 = vector.broadcast %68 : vector<1x256xf32> to vector<80x256xf32>
    %70 = arith.mulf %67, %69 : vector<80x256xf32>
    %71 = arith.truncf %70 : vector<80x256xf32> to vector<80x256xbf16>
    %c80_25 = arith.constant 80 : index
    %c0_26 = arith.constant 0 : index
    %72 = vector.load %arg9[%c80_25, %c0_26] : memref<720x256xbf16, #tpu.memory_space<vmem>>, vector<80x256xbf16>
    tpu.vector_store %arg9[%c80_25, %c0_26], %71 {strides = array<i32>} : memref<720x256xbf16, #tpu.memory_space<vmem>>, vector<80x256xbf16>,
    %c15_i32_27 = arith.constant 15 : i32
    %73 = tpu.dynamic_rotate %60 by %c15_i32_27 dim 1 : vector<80x256xf32>, i32 -> vector<80x256xf32>
    %74 = vector.extract_strided_slice %0 {offsets = [2, 0], sizes = [1, 256], strides = [1, 1]} : vector<9x256xf32> to vector<1x256xf32>
    %75 = vector.broadcast %74 : vector<1x256xf32> to vector<80x256xf32>
    %76 = arith.mulf %73, %75 : vector<80x256xf32>
    %77 = arith.truncf %76 : vector<80x256xf32> to vector<80x256xbf16>
    %c160 = arith.constant 160 : index
    %c0_28 = arith.constant 0 : index
    %78 = vector.load %arg9[%c160, %c0_28] : memref<720x256xbf16, #tpu.memory_space<vmem>>, vector<80x256xbf16>
    tpu.vector_store %arg9[%c160, %c0_28], %77 {strides = array<i32>} : memref<720x256xbf16, #tpu.memory_space<vmem>>, vector<80x256xbf16>,
    %c1_i32_29 = arith.constant 1 : i32
    %79 = tpu.dynamic_rotate %60 by %c1_i32_29 dim 1 : vector<80x256xf32>, i32 -> vector<80x256xf32>
    %80 = vector.extract_strided_slice %0 {offsets = [3, 0], sizes = [1, 256], strides = [1, 1]} : vector<9x256xf32> to vector<1x256xf32>
    %81 = vector.broadcast %80 : vector<1x256xf32> to vector<80x256xf32>
    %82 = arith.mulf %79, %81 : vector<80x256xf32>
    %83 = arith.truncf %82 : vector<80x256xf32> to vector<80x256xbf16>
    %c240 = arith.constant 240 : index
    %c0_30 = arith.constant 0 : index
    %84 = vector.load %arg9[%c240, %c0_30] : memref<720x256xbf16, #tpu.memory_space<vmem>>, vector<80x256xbf16>
    tpu.vector_store %arg9[%c240, %c0_30], %83 {strides = array<i32>} : memref<720x256xbf16, #tpu.memory_space<vmem>>, vector<80x256xbf16>,
    %85 = arith.truncf %60 : vector<80x256xf32> to vector<80x256xbf16>
    %c320 = arith.constant 320 : index
    %c0_31 = arith.constant 0 : index
    %86 = vector.load %arg9[%c320, %c0_31] : memref<720x256xbf16, #tpu.memory_space<vmem>>, vector<80x256xbf16>
    tpu.vector_store %arg9[%c320, %c0_31], %85 {strides = array<i32>} : memref<720x256xbf16, #tpu.memory_space<vmem>>, vector<80x256xbf16>,
    %c255_i32_32 = arith.constant 255 : i32
    %87 = tpu.dynamic_rotate %60 by %c255_i32_32 dim 1 : vector<80x256xf32>, i32 -> vector<80x256xf32>
    %88 = vector.extract_strided_slice %0 {offsets = [5, 0], sizes = [1, 256], strides = [1, 1]} : vector<9x256xf32> to vector<1x256xf32>
    %89 = vector.broadcast %88 : vector<1x256xf32> to vector<80x256xf32>
    %90 = arith.mulf %87, %89 : vector<80x256xf32>
    %91 = arith.truncf %90 : vector<80x256xf32> to vector<80x256xbf16>
    %c400 = arith.constant 400 : index
    %c0_33 = arith.constant 0 : index
    %92 = vector.load %arg9[%c400, %c0_33] : memref<720x256xbf16, #tpu.memory_space<vmem>>, vector<80x256xbf16>
    tpu.vector_store %arg9[%c400, %c0_33], %91 {strides = array<i32>} : memref<720x256xbf16, #tpu.memory_space<vmem>>, vector<80x256xbf16>,
    %c241_i32_34 = arith.constant 241 : i32
    %93 = tpu.dynamic_rotate %60 by %c241_i32_34 dim 1 : vector<80x256xf32>, i32 -> vector<80x256xf32>
    %94 = vector.extract_strided_slice %0 {offsets = [6, 0], sizes = [1, 256], strides = [1, 1]} : vector<9x256xf32> to vector<1x256xf32>
    %95 = vector.broadcast %94 : vector<1x256xf32> to vector<80x256xf32>
    %96 = arith.mulf %93, %95 : vector<80x256xf32>
    %97 = arith.truncf %96 : vector<80x256xf32> to vector<80x256xbf16>
    %c480 = arith.constant 480 : index
    %c0_35 = arith.constant 0 : index
    %98 = vector.load %arg9[%c480, %c0_35] : memref<720x256xbf16, #tpu.memory_space<vmem>>, vector<80x256xbf16>
    tpu.vector_store %arg9[%c480, %c0_35], %97 {strides = array<i32>} : memref<720x256xbf16, #tpu.memory_space<vmem>>, vector<80x256xbf16>,
    %c240_i32_36 = arith.constant 240 : i32
    %99 = tpu.dynamic_rotate %60 by %c240_i32_36 dim 1 : vector<80x256xf32>, i32 -> vector<80x256xf32>
    %100 = vector.extract_strided_slice %0 {offsets = [7, 0], sizes = [1, 256], strides = [1, 1]} : vector<9x256xf32> to vector<1x256xf32>
    %101 = vector.broadcast %100 : vector<1x256xf32> to vector<80x256xf32>
    %102 = arith.mulf %99, %101 : vector<80x256xf32>
    %103 = arith.truncf %102 : vector<80x256xf32> to vector<80x256xbf16>
    %c560 = arith.constant 560 : index
    %c0_37 = arith.constant 0 : index
    %104 = vector.load %arg9[%c560, %c0_37] : memref<720x256xbf16, #tpu.memory_space<vmem>>, vector<80x256xbf16>
    tpu.vector_store %arg9[%c560, %c0_37], %103 {strides = array<i32>} : memref<720x256xbf16, #tpu.memory_space<vmem>>, vector<80x256xbf16>,
    %c239_i32_38 = arith.constant 239 : i32
    %105 = tpu.dynamic_rotate %60 by %c239_i32_38 dim 1 : vector<80x256xf32>, i32 -> vector<80x256xf32>
    %106 = vector.extract_strided_slice %0 {offsets = [8, 0], sizes = [1, 256], strides = [1, 1]} : vector<9x256xf32> to vector<1x256xf32>
    %107 = vector.broadcast %106 : vector<1x256xf32> to vector<80x256xf32>
    %108 = arith.mulf %105, %107 : vector<80x256xf32>
    %109 = arith.truncf %108 : vector<80x256xf32> to vector<80x256xbf16>
    %c640 = arith.constant 640 : index
    %c0_39 = arith.constant 0 : index
    %110 = vector.load %arg9[%c640, %c0_39] : memref<720x256xbf16, #tpu.memory_space<vmem>>, vector<80x256xbf16>
    tpu.vector_store %arg9[%c640, %c0_39], %109 {strides = array<i32>} : memref<720x256xbf16, #tpu.memory_space<vmem>>, vector<80x256xbf16>,
    %c0_40 = arith.constant 0 : index
    %c0_41 = arith.constant 0 : index
    %111 = vector.load %arg5[%c0_40, %c0_41] : memref<16x720xbf16, #tpu.memory_space<vmem>>, vector<16x720xbf16>
    %c0_42 = arith.constant 0 : index
    %c0_43 = arith.constant 0 : index
    %112 = vector.load %arg6[%c0_42, %c0_43] : memref<16x1xf32, #tpu.memory_space<vmem>>, vector<16x1xf32>
    %c0_44 = arith.constant 0 : index
    %c0_45 = arith.constant 0 : index
    %113 = vector.load %arg9[%c0_44, %c0_45] : memref<720x256xbf16, #tpu.memory_space<vmem>>, vector<720x256xbf16>
    %cst_46 = arith.constant dense<0.000000e+00> : vector<16x256xf32>
    %114 = tpu.matmul %111, %113, %cst_46 {dimension_numbers = #tpu.dot_dimension_numbers<[1], [0], [0], [1], [0, 0, 1, 1], [], []>} : vector<16x720xbf16>, vector<720x256xbf16>, vector<16x256xf32> -> vector<16x256xf32>
    %115 = vector.broadcast %112 : vector<16x1xf32> to vector<16x256xf32>
    %116 = arith.addf %114, %115 : vector<16x256xf32>
    %c0_47 = arith.constant 0 : index
    %c0_48 = arith.constant 0 : index
    %c0_49 = arith.constant 0 : index
    %117 = vector.load %arg7[%c0_47, %c0_48, %c0_49] : memref<1x16x256xf32, #tpu.memory_space<vmem>>, vector<1x16x256xf32>
    %118 = vector.shape_cast %117 : vector<1x16x256xf32> to vector<16x256xf32>
    %119 = vector.shape_cast %116 : vector<16x256xf32> to vector<1x16x256xf32>
    tpu.vector_store %arg7[%c0_47, %c0_48, %c0_49], %119 {strides = array<i32>} : memref<1x16x256xf32, #tpu.memory_space<vmem>>, vector<1x16x256xf32>,
    return
  }
  func.func @transform_0(%arg0: i32) -> (i32, i32, i32) {
    %c0_i32 = arith.constant 0 : i32
    %c0_i32_0 = arith.constant 0 : i32
    %c0_i32_1 = arith.constant 0 : i32
    return %arg0, %c0_i32, %c0_i32_0 : i32, i32, i32
  }
  func.func @transform_1(%arg0: i32) -> (i32, i32) {
    %c0_i32 = arith.constant 0 : i32
    %c0_i32_0 = arith.constant 0 : i32
    %c0_i32_1 = arith.constant 0 : i32
    return %c0_i32, %c0_i32_0 : i32, i32
  }
  func.func @transform_2(%arg0: i32) -> (i32, i32) {
    %c0_i32 = arith.constant 0 : i32
    %c0_i32_0 = arith.constant 0 : i32
    %c0_i32_1 = arith.constant 0 : i32
    return %c0_i32, %c0_i32_0 : i32, i32
  }
  func.func @transform_3(%arg0: i32) -> (i32, i32) {
    %c0_i32 = arith.constant 0 : i32
    %c0_i32_0 = arith.constant 0 : i32
    %c0_i32_1 = arith.constant 0 : i32
    return %c0_i32, %c0_i32_0 : i32, i32
  }
  func.func @transform_4(%arg0: i32) -> (i32, i32) {
    %c0_i32 = arith.constant 0 : i32
    %c0_i32_0 = arith.constant 0 : i32
    %c0_i32_1 = arith.constant 0 : i32
    return %c0_i32, %c0_i32_0 : i32, i32
  }
  func.func @transform_5(%arg0: i32) -> (i32, i32) {
    %c0_i32 = arith.constant 0 : i32
    %c0_i32_0 = arith.constant 0 : i32
    %c0_i32_1 = arith.constant 0 : i32
    return %c0_i32, %c0_i32_0 : i32, i32
  }
  func.func @transform_6(%arg0: i32) -> (i32, i32, i32) {
    %c0_i32 = arith.constant 0 : i32
    %c0_i32_0 = arith.constant 0 : i32
    %c0_i32_1 = arith.constant 0 : i32
    return %arg0, %c0_i32, %c0_i32_0 : i32, i32, i32
  }
}

</mosaic_0001>

<llo_original>
// kernel: tpu_custom_call.1
$region0: #{tpu_custom_call.1}
  #allocation0 [shape = 'u32[]', space=smem, size = 0x4, offset = 0x4, fixed_abs, tag = 'smem constant byte address 0x4 - core index']
  #allocation1 [shape = 'u32[72,128]{1,0:T(1,128)}', space=vmem, size = 0x9000, scoped, tag = 'internal scratch']
  #allocation2 [shape = 'bf16[144,256]{1,0:T(8,128)(2,1)}', space=vmem, size = 0x12000, scoped, tag = 'scratch operand']
  #allocation3 [shape = 'bf16[720,256]{1,0:T(8,128)(2,1)}', space=vmem, size = 0x5a000, scoped, tag = 'scratch operand']
  %s0 = inlined_call_operand.vmem [shape: f32[2,16,256], index: 0, kind: input, shape index: {}]
  %s1 = inlined_call_operand.vmem [shape: f32[9,256], index: 1, kind: input, shape index: {}]
  %s2 = inlined_call_operand.vmem [shape: bf16[80,144], index: 2, kind: input, shape index: {}]
  %s3 = inlined_call_operand.vmem [shape: f32[80,1], index: 3, kind: input, shape index: {}]
  %s4 = inlined_call_operand.vmem [shape: bf16[16,720], index: 4, kind: input, shape index: {}]
  %s5 = inlined_call_operand.vmem [shape: f32[16,1], index: 5, kind: input, shape index: {}]
  %s6 = inlined_call_operand.hbm [shape: f32[2,16,256], index: 6, kind: output, shape index: {}]
  %s7 = sld [smem:[#allocation0]]
  $region57: #{tpu_custom_call.1} parent=0
    _
  %s9 = ssub.s32 1, %s7
  %s10 = scalar_select 0, %s9, %s7
  $region1: #{tpu_custom_call.1} parent=0
    #allocation4 [shape = 'u8[32768]{0}', space=vmem, size = 0x8000, scoped, tag = 'output window, operand 0']
    #allocation5 [shape = 's32[2]{0}', space=sflag, size = 0x8, scoped, tag = 'scoped memory for tpu_custom_call.1']
    %11 = vsyncpa [#allocation5], 0
    %s12 = scalar_lea.sflag [#allocation5], 1
    %13 = vsyncpa %s12, 0
    loop: start=0, step=1, limit=4
    $region2: #{tpu_custom_call.1} parent=1 // loop_pre_header
      _
    $region3: #{tpu_custom_call.1} parent=1 // loop_header
      %s15 = sphi 0, %s19
      %p16 = scmp.ge.s32.totalorder %s15, 4
      %s25 = sphi 0, %s27
      %s28 = sphi 0, %s25
      %s29 = sphi 0, %s28
      %s45 = sphi 0, %s29
      %s49 = sphi 0, %s49
      %s51 = sphi 0, %s49
      %s52 = sphi 0, %s51
      %s66 = sphi 0, %s52
      %s70 = sphi 0, %s70
      %s72 = sphi 0, %s70
      %s73 = sphi 0, %s72
      %s87 = sphi 0, %s73
      %s91 = sphi 0, %s91
      %s93 = sphi 0, %s91
      %s94 = sphi 0, %s93
      %s108 = sphi 0, %s94
      %s112 = sphi 0, %s112
      %s114 = sphi 0, %s112
      %s115 = sphi 0, %s114
      %s129 = sphi 0, %s115
      %s133 = sphi 0, %s133
      %s135 = sphi 0, %s133
      %s136 = sphi 0, %s135
      %s150 = sphi 0, %s136
      %s156 = sphi 0, %s158
      %s159 = sphi 0, %s156
      %s160 = sphi 0, %s159
      %s176 = sphi 0, %s160
    $region4: #{tpu_custom_call.1} parent=1 // loop_header_branch
      %18 = sbr.rel (%p16) target = $region8
    $region5: #{tpu_custom_call.1} parent=1 // loop_body
      %s20 = ssub.s32 %s15, 1
      %s21 = ssub.s32 %s15, 2
      %s22 = sadd.s32 %s15, 1
      %s23 = ssub.s32 %s15, %s22
      %p24 = scmp.eq.s32.totalorder %s23, 0
      %s26 = sadd.s32 %s25, 1
      %s27 = scalar_select %p24, %s25, %s26
      %p30 = pneg %p24
      %p31 = scmp.eq.s32.totalorder %s15, 1
      %p32 = por %p30, %p31
      %p33 = scmp.ne.s32.totalorder %s25, %s28
      %p34 = scmp.eq.s32.totalorder %s15, 0
      %p35 = por %p33, %p34
      %p36 = scmp.ne.s32.totalorder %s25, %s28
      %p37 = scmp.eq.s32.totalorder %s20, 1
      %p38 = por %p36, %p37
      %p39 = scmp.ne.s32.totalorder %s28, %s29
      %p40 = scmp.eq.s32.totalorder %s20, 0
      %p41 = por %p39, %p40
      %p42 = scmp.ne.s32.totalorder %s28, %s29
      %p43 = scmp.eq.s32.totalorder %s21, 1
      %p44 = por %p42, %p43
      %p46 = scmp.ne.s32.totalorder %s29, %s45
      %p47 = scmp.eq.s32.totalorder %s21, 0
      %p48 = por %p46, %p47
      %s50 = sadd.s32 %s49, 1
      %p53 = scmp.eq.s32.totalorder %s15, 1
      %p54 = scmp.ne.s32.totalorder %s49, %s51
      %p55 = scmp.eq.s32.totalorder %s15, 0
      %p56 = por %p54, %p55
      %p57 = scmp.ne.s32.totalorder %s49, %s51
      %p58 = scmp.eq.s32.totalorder %s20, 1
      %p59 = por %p57, %p58
      %p60 = scmp.ne.s32.totalorder %s51, %s52
      %p61 = scmp.eq.s32.totalorder %s20, 0
      %p62 = por %p60, %p61
      %p63 = scmp.ne.s32.totalorder %s51, %s52
      %p64 = scmp.eq.s32.totalorder %s21, 1
      %p65 = por %p63, %p64
      %p67 = scmp.ne.s32.totalorder %s52, %s66
      %p68 = scmp.eq.s32.totalorder %s21, 0
      %p69 = por %p67, %p68
      %s71 = sadd.s32 %s70, 1
      %p74 = scmp.eq.s32.totalorder %s15, 1
      %p75 = scmp.ne.s32.totalorder %s70, %s72
      %p76 = scmp.eq.s32.totalorder %s15, 0
      %p77 = por %p75, %p76
      %p78 = scmp.ne.s32.totalorder %s70, %s72
      %p79 = scmp.eq.s32.totalorder %s20, 1
      %p80 = por %p78, %p79
      %p81 = scmp.ne.s32.totalorder %s72, %s73
      %p82 = scmp.eq.s32.totalorder %s20, 0
      %p83 = por %p81, %p82
      %p84 = scmp.ne.s32.totalorder %s72, %s73
      %p85 = scmp.eq.s32.totalorder %s21, 1
      %p86 = por %p84, %p85
      %p88 = scmp.ne.s32.totalorder %s73, %s87
      %p89 = scmp.eq.s32.totalorder %s21, 0
      %p90 = por %p88, %p89
      %s92 = sadd.s32 %s91, 1
      %p95 = scmp.eq.s32.totalorder %s15, 1
      %p96 = scmp.ne.s32.totalorder %s91, %s93
      %p97 = scmp.eq.s32.totalorder %s15, 0
      %p98 = por %p96, %p97
      %p99 = scmp.ne.s32.totalorder %s91, %s93
      %p100 = scmp.eq.s32.totalorder %s20, 1
      %p101 = por %p99, %p100
      %p102 = scmp.ne.s32.totalorder %s93, %s94
      %p103 = scmp.eq.s32.totalorder %s20, 0
      %p104 = por %p102, %p103
      %p105 = scmp.ne.s32.totalorder %s93, %s94
      %p106 = scmp.eq.s32.totalorder %s21, 1
      %p107 = por %p105, %p106
      %p109 = scmp.ne.s32.totalorder %s94, %s108
      %p110 = scmp.eq.s32.totalorder %s21, 0
      %p111 = por %p109, %p110
      %s113 = sadd.s32 %s112, 1
      %p116 = scmp.eq.s32.totalorder %s15, 1
      %p117 = scmp.ne.s32.totalorder %s112, %s114
      %p118 = scmp.eq.s32.totalorder %s15, 0
      %p119 = por %p117, %p118
      %p120 = scmp.ne.s32.totalorder %s112, %s114
      %p121 = scmp.eq.s32.totalorder %s20, 1
      %p122 = por %p120, %p121
      %p123 = scmp.ne.s32.totalorder %s114, %s115
      %p124 = scmp.eq.s32.totalorder %s20, 0
      %p125 = por %p123, %p124
      %p126 = scmp.ne.s32.totalorder %s114, %s115
      %p127 = scmp.eq.s32.totalorder %s21, 1
      %p128 = por %p126, %p127
      %p130 = scmp.ne.s32.totalorder %s115, %s129
      %p131 = scmp.eq.s32.totalorder %s21, 0
      %p132 = por %p130, %p131
      %s134 = sadd.s32 %s133, 1
      %p137 = scmp.eq.s32.totalorder %s15, 1
      %p138 = scmp.ne.s32.totalorder %s133, %s135
      %p139 = scmp.eq.s32.totalorder %s15, 0
      %p140 = por %p138, %p139
      %p141 = scmp.ne.s32.totalorder %s133, %s135
      %p142 = scmp.eq.s32.totalorder %s20, 1
      %p143 = por %p141, %p142
      %p144 = scmp.ne.s32.totalorder %s135, %s136
      %p145 = scmp.eq.s32.totalorder %s20, 0
      %p146 = por %p144, %p145
      %p147 = scmp.ne.s32.totalorder %s135, %s136
      %p148 = scmp.eq.s32.totalorder %s21, 1
      %p149 = por %p147, %p148
      %p151 = scmp.ne.s32.totalorder %s136, %s150
      %p152 = scmp.eq.s32.totalorder %s21, 0
      %p153 = por %p151, %p152
      %s154 = ssub.s32 %s15, %s22
      %p155 = scmp.eq.s32.totalorder %s154, 0
      %s157 = sadd.s32 %s156, 1
      %s158 = scalar_select %p155, %s156, %s157
      %p161 = pneg %p155
      %p162 = scmp.eq.s32.totalorder %s15, 1
      %p163 = por %p161, %p162
      %p164 = scmp.ne.s32.totalorder %s156, %s159
      %p165 = scmp.eq.s32.totalorder %s15, 0
      %p166 = por %p164, %p165
      %p167 = scmp.ne.s32.totalorder %s156, %s159
      %p168 = scmp.eq.s32.totalorder %s20, 1
      %p169 = por %p167, %p168
      %p170 = scmp.ne.s32.totalorder %s159, %s160
      %p171 = scmp.eq.s32.totalorder %s20, 0
      %p172 = por %p170, %p171
      %p173 = scmp.ne.s32.totalorder %s159, %s160
      %p174 = scmp.eq.s32.totalorder %s21, 1
      %p175 = por %p173, %p174
      %p177 = scmp.ne.s32.totalorder %s160, %s176
      %p178 = scmp.eq.s32.totalorder %s21, 0
      %p179 = por %p177, %p178
      %p180 = scmp.le.s32.totalorder 1, %s15
      %p181 = scmp.lt.s32.totalorder %s15, 3
      %p182 = pnand %p180, %p181
      %p183 = pneg %p182
      // Predicated region
      $region9: #{tpu_custom_call.1} parent=5 // pred_check
        _
      $region10: #{tpu_custom_call.1} parent=5 // pred_check_branch
        %185 = sbr.rel (%p182) target = $region12
      $region11: #{tpu_custom_call.1} parent=5 // pred_region
        %s186 = ssub.s32 %s15, 1
        // Predicated region
        $region13: #{tpu_custom_call.1} parent=11 // pred_check
          %p187 = pneg %p62
        $region14: #{tpu_custom_call.1} parent=11 // pred_check_branch
          %189 = sbr.rel (%p187) target = $region16
        $region15: #{tpu_custom_call.1} parent=11 // pred_region
          _
        $region16: #{tpu_custom_call.1} parent=11 // pred_fallthru
          _
        // Predicated region
        $region17: #{tpu_custom_call.1} parent=11 // pred_check
          %p190 = pneg %p83
        $region18: #{tpu_custom_call.1} parent=11 // pred_check_branch
          %192 = sbr.rel (%p190) target = $region20
        $region19: #{tpu_custom_call.1} parent=11 // pred_region
          _
        $region20: #{tpu_custom_call.1} parent=11 // pred_fallthru
          _
        // Predicated region
        $region21: #{tpu_custom_call.1} parent=11 // pred_check
          %p193 = pneg %p104
        $region22: #{tpu_custom_call.1} parent=11 // pred_check_branch
          %195 = sbr.rel (%p193) target = $region24
        $region23: #{tpu_custom_call.1} parent=11 // pred_region
          _
        $region24: #{tpu_custom_call.1} parent=11 // pred_fallthru
          _
        // Predicated region
        $region25: #{tpu_custom_call.1} parent=11 // pred_check
          %p196 = pneg %p125
        $region26: #{tpu_custom_call.1} parent=11 // pred_check_branch
          %198 = sbr.rel (%p196) target = $region28
        $region27: #{tpu_custom_call.1} parent=11 // pred_region
          _
        $region28: #{tpu_custom_call.1} parent=11 // pred_fallthru
          _
        // Predicated region
        $region29: #{tpu_custom_call.1} parent=11 // pred_check
          %p199 = pneg %p146
        $region30: #{tpu_custom_call.1} parent=11 // pred_check_branch
          %201 = sbr.rel (%p199) target = $region32
        $region31: #{tpu_custom_call.1} parent=11 // pred_region
          _
        $region32: #{tpu_custom_call.1} parent=11 // pred_fallthru
          _
      $region12: #{tpu_custom_call.1} parent=5 // pred_fallthru
        _
      %p202 = scmp.lt.s32.totalorder %s15, 2
      // Predicated region
      $region33: #{tpu_custom_call.1} parent=5 // pred_check
        %p203 = pneg %p202
      $region34: #{tpu_custom_call.1} parent=5 // pred_check_branch
        %205 = sbr.rel (%p203) target = $region36
      $region35: #{tpu_custom_call.1} parent=5 // pred_region
        // Predicated region
        $region37: #{tpu_custom_call.1} parent=35 // pred_check
          %p206 = pneg %p35
        $region38: #{tpu_custom_call.1} parent=35 // pred_check_branch
          %208 = sbr.rel (%p206) target = $region40
        $region39: #{tpu_custom_call.1} parent=35 // pred_region
          %p209 = scmp.lt.s32.totalorder %s15, 1
          %s210 = scalar_select %p209, %s15, 1
          %s211 = smul.addr %s210, 4
          %s212 = smul.addr %s211, 8
          %s213 = scalar_lea.vmem %s0, %s212
        $region40: #{tpu_custom_call.1} parent=35 // pred_fallthru
          _
      $region36: #{tpu_custom_call.1} parent=5 // pred_fallthru
        _
      %p214 = scmp.le.s32.totalorder 1, %s15
      %p215 = scmp.lt.s32.totalorder %s15, 3
      %p216 = pnand %p214, %p215
      %p217 = pneg %p216
      // Predicated region
      $region41: #{tpu_custom_call.1} parent=5 // pred_check
        _
      $region42: #{tpu_custom_call.1} parent=5 // pred_check_branch
        %219 = sbr.rel (%p216) target = $region44
      $region43: #{tpu_custom_call.1} parent=5 // pred_region
        %s220 = ssub.s32 %s15, 1
        %p221 = scmp.lt.s32.totalorder %s20, 1
        %s222 = scalar_select %p221, %s20, 1
        %s223 = smul.addr %s222, 4
        %s224 = smul.addr %s223, 8
        %s225 = scalar_lea.vmem %s0, %s224
        %p226 = pneg %p41
        %p227 = pneg %p38
        %p228 = pneg %p62
        %p229 = pneg %p59
        %p230 = pneg %p83
        %p231 = pneg %p80
        %p232 = pneg %p104
        %p233 = pneg %p101
        %p234 = pneg %p125
        %p235 = pneg %p122
        %p236 = pneg %p146
        %p237 = pneg %p143
        %p238 = pneg %p172
        %p239 = pneg %p169
        %s240 = sand.u32 %s159, 1
        %s241 = scalar_lea.sflag [#allocation5], %s240
        %s242 = sand.u32 %s159, 1
        %s243 = smul.addr %s242, 32
        %s244 = scalar_lea.vmem [#allocation4], %s243
        %p245 = scmp.lt.s32.totalorder %s20, 1
        %s246 = scalar_select %p245, %s20, 1
        %s247 = smul.addr %s246, 4
        %s248 = smul.addr %s247, 8
        %s249 = scalar_lea.vmem %s0, %s248
        %v251 = vld [vmem:[%s1] sm:$0xff]
        %v252 = vld [vmem:[%s1 + $0x8] sm:$0xff]
        %v253 = vld [vmem:[%s1 + $0x10] sm:$0x1]
        %v254 = vld [vmem:[%s1 + $0x18] sm:$0x1]
        %v255 = vld [vmem:[%s249] sm:$0xff]
        %v256 = vld [vmem:[%s249 + $0x8] sm:$0xff]
        %v257 = vld [vmem:[%s249 + $0x10] sm:$0xff]
        %v258 = vld [vmem:[%s249 + $0x18] sm:$0xff]
        %259 = vrot.lane.b32.xlu0 %v255, 17
        %v260 = vpop.permute.xlu0 %259
        %261 = vrot.lane.b32.xlu0 %v257, 17
        %v262 = vpop.permute.xlu0 %261
        %263 = vrot.lane.b32.xlu0 %v256, 17
        %v264 = vpop.permute.xlu0 %263
        %265 = vrot.lane.b32.xlu0 %v258, 17
        %v266 = vpop.permute.xlu0 %265
        %v267 = vlaneseq
        %v268 = vand.u32 %v267, 127
        %vm269 = vcmp.lt.s32.totalorder %v268, 17
        %v270 = vsel %vm269, %v260, %v264
        %v271 = vsel %vm269, %v262, %v266
        %v272 = vsel %vm269, %v264, %v260
        %v273 = vsel %vm269, %v266, %v262
        %v274 = vperm.slane %v251, 0
        %v275 = vperm.slane %v252, 0
        %v276 = vmul.f32 %v272, %v274
        %v277 = vmul.f32 %v270, %v275
        %v278 = vmul.f32 %v273, %v274
        %v279 = vmul.f32 %v271, %v275
        %v280 = vpack.c.bf16 %v277, %v276
        %v281 = vpack.c.bf16 %v279, %v278
        %282 = vst [vmem:[#allocation2] sm:$0xff] %v280
        %283 = vst [vmem:[#allocation2 + $0x8] sm:$0xff] %v281
        %284 = vrot.lane.b32.xlu0 %v255, 16
        %v285 = vpop.permute.xlu0 %284
        %286 = vrot.lane.b32.xlu0 %v257, 16
        %v287 = vpop.permute.xlu0 %286
        %288 = vrot.lane.b32.xlu0 %v256, 16
        %v289 = vpop.permute.xlu0 %288
        %290 = vrot.lane.b32.xlu0 %v258, 16
        %v291 = vpop.permute.xlu0 %290
        %vm292 = vcmp.lt.s32.totalorder %v268, 16
        %v293 = vsel %vm292, %v285, %v289
        %v294 = vsel %vm292, %v287, %v291
        %v295 = vsel %vm292, %v289, %v285
        %v296 = vsel %vm292, %v291, %v287
        %v297 = vperm.slane %v251, 1
        %v298 = vperm.slane %v252, 1
        %v299 = vmul.f32 %v295, %v297
        %v300 = vmul.f32 %v293, %v298
        %v301 = vmul.f32 %v296, %v297
        %v302 = vmul.f32 %v294, %v298
        %v303 = vpack.c.bf16 %v300, %v299
        %v304 = vpack.c.bf16 %v302, %v301
        %305 = vst [vmem:[#allocation2 + $0x10] sm:$0xff] %v303
        %306 = vst [vmem:[#allocation2 + $0x18] sm:$0xff] %v304
        %307 = vrot.lane.b32.xlu0 %v255, 15
        %v308 = vpop.permute.xlu0 %307
        %309 = vrot.lane.b32.xlu0 %v257, 15
        %v310 = vpop.permute.xlu0 %309
        %311 = vrot.lane.b32.xlu0 %v256, 15
        %v312 = vpop.permute.xlu0 %311
        %313 = vrot.lane.b32.xlu0 %v258, 15
        %v314 = vpop.permute.xlu0 %313
        %vm315 = vcmp.lt.s32.totalorder %v268, 15
        %v316 = vsel %vm315, %v308, %v312
        %v317 = vsel %vm315, %v310, %v314
        %v318 = vsel %vm315, %v312, %v308
        %v319 = vsel %vm315, %v314, %v310
        %v320 = vperm.slane %v251, 2
        %v321 = vperm.slane %v252, 2
        %v322 = vmul.f32 %v318, %v320
        %v323 = vmul.f32 %v316, %v321
        %v324 = vmul.f32 %v319, %v320
        %v325 = vmul.f32 %v317, %v321
        %v326 = vpack.c.bf16 %v323, %v322
        %v327 = vpack.c.bf16 %v325, %v324
        %328 = vst [vmem:[#allocation2 + $0x20] sm:$0xff] %v326
        %329 = vst [vmem:[#allocation2 + $0x28] sm:$0xff] %v327
        %330 = vrot.lane.b32.xlu0 %v255, 1
        %v331 = vpop.permute.xlu0 %330
        %332 = vrot.lane.b32.xlu0 %v257, 1
        %v333 = vpop.permute.xlu0 %332
        %334 = vrot.lane.b32.xlu0 %v256, 1
        %v335 = vpop.permute.xlu0 %334
        %336 = vrot.lane.b32.xlu0 %v258, 1
        %v337 = vpop.permute.xlu0 %336
        %vm338 = vcmp.lt.s32.totalorder %v268, 1
        %v339 = vsel %vm338, %v331, %v335
        %v340 = vsel %vm338, %v333, %v337
        %v341 = vsel %vm338, %v335, %v331
        %v342 = vsel %vm338, %v337, %v333
        %v343 = vperm.slane %v251, 3
        %v344 = vperm.slane %v252, 3
        %v345 = vmul.f32 %v341, %v343
        %v346 = vmul.f32 %v339, %v344
        %v347 = vmul.f32 %v342, %v343
        %v348 = vmul.f32 %v340, %v344
        %v349 = vpack.c.bf16 %v346, %v345
        %v350 = vpack.c.bf16 %v348, %v347
        %351 = vst [vmem:[#allocation2 + $0x30] sm:$0xff] %v349
        %352 = vst [vmem:[#allocation2 + $0x38] sm:$0xff] %v350
        %v353 = vpack.c.bf16 %v256, %v255
        %v354 = vpack.c.bf16 %v258, %v257
        %355 = vst [vmem:[#allocation2 + $0x40] sm:$0xff] %v353
        %356 = vst [vmem:[#allocation2 + $0x48] sm:$0xff] %v354
        %357 = vrot.lane.b32.xlu0 %v255, 127
        %v358 = vpop.permute.xlu0 %357
        %359 = vrot.lane.b32.xlu0 %v257, 127
        %v360 = vpop.permute.xlu0 %359
        %361 = vrot.lane.b32.xlu0 %v256, 127
        %v362 = vpop.permute.xlu0 %361
        %363 = vrot.lane.b32.xlu0 %v258, 127
        %v364 = vpop.permute.xlu0 %363
        %vm365 = vcmp.lt.s32.totalorder %v268, 127
        %v366 = vsel %vm365, %v358, %v362
        %v367 = vsel %vm365, %v360, %v364
        %v368 = vsel %vm365, %v362, %v358
        %v369 = vsel %vm365, %v364, %v360
        %v370 = vperm.slane %v251, 5
        %v371 = vperm.slane %v252, 5
        %v372 = vmul.f32 %v366, %v370
        %v373 = vmul.f32 %v368, %v371
        %v374 = vmul.f32 %v367, %v370
        %v375 = vmul.f32 %v369, %v371
        %v376 = vpack.c.bf16 %v373, %v372
        %v377 = vpack.c.bf16 %v375, %v374
        %378 = vst [vmem:[#allocation2 + $0x50] sm:$0xff] %v376
        %379 = vst [vmem:[#allocation2 + $0x58] sm:$0xff] %v377
        %380 = vrot.lane.b32.xlu0 %v255, 113
        %v381 = vpop.permute.xlu0 %380
        %382 = vrot.lane.b32.xlu0 %v257, 113
        %v383 = vpop.permute.xlu0 %382
        %384 = vrot.lane.b32.xlu0 %v256, 113
        %v385 = vpop.permute.xlu0 %384
        %386 = vrot.lane.b32.xlu0 %v258, 113
        %v387 = vpop.permute.xlu0 %386
        %vm388 = vcmp.lt.s32.totalorder %v268, 113
        %v389 = vsel %vm388, %v381, %v385
        %v390 = vsel %vm388, %v383, %v387
        %v391 = vsel %vm388, %v385, %v381
        %v392 = vsel %vm388, %v387, %v383
        %v393 = vperm.slane %v251, 6
        %v394 = vperm.slane %v252, 6
        %v395 = vmul.f32 %v389, %v393
        %v396 = vmul.f32 %v391, %v394
        %v397 = vmul.f32 %v390, %v393
        %v398 = vmul.f32 %v392, %v394
        %v399 = vpack.c.bf16 %v396, %v395
        %v400 = vpack.c.bf16 %v398, %v397
        %401 = vst [vmem:[#allocation2 + $0x60] sm:$0xff] %v399
        %402 = vst [vmem:[#allocation2 + $0x68] sm:$0xff] %v400
        %403 = vrot.lane.b32.xlu0 %v255, 112
        %v404 = vpop.permute.xlu0 %403
        %405 = vrot.lane.b32.xlu0 %v257, 112
        %v406 = vpop.permute.xlu0 %405
        %407 = vrot.lane.b32.xlu0 %v256, 112
        %v408 = vpop.permute.xlu0 %407
        %409 = vrot.lane.b32.xlu0 %v258, 112
        %v410 = vpop.permute.xlu0 %409
        %vm411 = vcmp.lt.s32.totalorder %v268, 112
        %v412 = vsel %vm411, %v404, %v408
        %v413 = vsel %vm411, %v406, %v410
        %v414 = vsel %vm411, %v408, %v404
        %v415 = vsel %vm411, %v410, %v406
        %v416 = vperm.slane %v251, 7
        %v417 = vperm.slane %v252, 7
        %v418 = vmul.f32 %v412, %v416
        %v419 = vmul.f32 %v414, %v417
        %v420 = vmul.f32 %v413, %v416
        %v421 = vmul.f32 %v415, %v417
        %v422 = vpack.c.bf16 %v419, %v418
        %v423 = vpack.c.bf16 %v421, %v420
        %424 = vst [vmem:[#allocation2 + $0x70] sm:$0xff] %v422
        %425 = vst [vmem:[#allocation2 + $0x78] sm:$0xff] %v423
        %426 = vrot.lane.b32.xlu0 %v255, 111
        %v427 = vpop.permute.xlu0 %426
        %428 = vrot.lane.b32.xlu0 %v257, 111
        %v429 = vpop.permute.xlu0 %428
        %430 = vrot.lane.b32.xlu0 %v256, 111
        %v431 = vpop.permute.xlu0 %430
        %432 = vrot.lane.b32.xlu0 %v258, 111
        %v433 = vpop.permute.xlu0 %432
        %vm434 = vcmp.lt.s32.totalorder %v268, 111
        %v435 = vsel %vm434, %v427, %v431
        %v436 = vsel %vm434, %v429, %v433
        %v437 = vsel %vm434, %v431, %v427
        %v438 = vsel %vm434, %v433, %v429
        %v439 = vperm.slane %v253, 0
        %v440 = vperm.slane %v254, 0
        %v441 = vmul.f32 %v435, %v439
        %v442 = vmul.f32 %v437, %v440
        %v443 = vmul.f32 %v436, %v439
        %v444 = vmul.f32 %v438, %v440
        %v445 = vpack.c.bf16 %v442, %v441
        %v446 = vpack.c.bf16 %v444, %v443
        %447 = vst [vmem:[#allocation2 + $0x80] sm:$0xff] %v445
        %448 = vst [vmem:[#allocation2 + $0x88] sm:$0xff] %v446
        %v449 = vld [vmem:[%s2] sm:$0xff]
        %v450 = vld [vmem:[%s2 + $0x8] sm:$0xff]
        %v451 = vld [vmem:[%s2 + $0x10] sm:$0xff]
        %v452 = vld [vmem:[%s2 + $0x18] sm:$0xff]
        %v453 = vld [vmem:[%s2 + $0x20] sm:$0xff]
        %v454 = vld [vmem:[%s2 + $0x28] sm:$0xff]
        %v455 = vld [vmem:[%s2 + $0x30] sm:$0xff]
        %v456 = vld [vmem:[%s2 + $0x38] sm:$0xff]
        %v457 = vld [vmem:[%s2 + $0x40] sm:$0xff]
        %v458 = vld [vmem:[%s2 + $0x48] sm:$0xff]
        %v459 = vld [vmem:[%s3] sm:$0xff]
        %v460 = vld [vmem:[%s3 + $0x8] sm:$0xff]
        %v461 = vld [vmem:[%s3 + $0x10] sm:$0xff]
        %v462 = vld [vmem:[%s3 + $0x18] sm:$0xff]
        %v463 = vld [vmem:[%s3 + $0x20] sm:$0xff]
        %v464 = vld [vmem:[%s3 + $0x28] sm:$0xff]
        %v465 = vld [vmem:[%s3 + $0x30] sm:$0xff]
        %v466 = vld [vmem:[%s3 + $0x38] sm:$0xff]
        %v467 = vld [vmem:[%s3 + $0x40] sm:$0xff]
        %v468 = vld [vmem:[%s3 + $0x48] sm:$0xff]
        %v469 = vld [vmem:[#allocation2] sm:$0xff]
        %v470 = vld [vmem:[#allocation2 + $0x8] sm:$0xff]
        %v471 = vld [vmem:[#allocation2 + $0x10] sm:$0xff]
        %v472 = vld [vmem:[#allocation2 + $0x18] sm:$0xff]
        %v473 = vld [vmem:[#allocation2 + $0x20] sm:$0xff]
        %v474 = vld [vmem:[#allocation2 + $0x28] sm:$0xff]
        %v475 = vld [vmem:[#allocation2 + $0x30] sm:$0xff]
        %v476 = vld [vmem:[#allocation2 + $0x38] sm:$0xff]
        %v477 = vld [vmem:[#allocation2 + $0x40] sm:$0xff]
        %v478 = vld [vmem:[#allocation2 + $0x48] sm:$0xff]
        %v479 = vld [vmem:[#allocation2 + $0x50] sm:$0xff]
        %v480 = vld [vmem:[#allocation2 + $0x58] sm:$0xff]
        %v481 = vld [vmem:[#allocation2 + $0x60] sm:$0xff]
        %v482 = vld [vmem:[#allocation2 + $0x68] sm:$0xff]
        %v483 = vld [vmem:[#allocation2 + $0x70] sm:$0xff]
        %v484 = vld [vmem:[#allocation2 + $0x78] sm:$0xff]
        %v485 = vld [vmem:[#allocation2 + $0x80] sm:$0xff]
        %v486 = vld [vmem:[#allocation2 + $0x88] sm:$0xff]
        %488 = vset.pattern.permute.xlu0 0
        %489 = vperm.xlu0 %488, %v459
        %v490 = vpop.permute.xlu0 %489
        %493 = vset.pattern.permute.xlu0 0
        %494 = vperm.xlu0 %493, %v460
        %v495 = vpop.permute.xlu0 %494
        %498 = vset.pattern.permute.xlu0 0
        %499 = vperm.xlu0 %498, %v461
        %v500 = vpop.permute.xlu0 %499
        %503 = vset.pattern.permute.xlu0 0
        %504 = vperm.xlu0 %503, %v462
        %v505 = vpop.permute.xlu0 %504
        %508 = vset.pattern.permute.xlu0 0
        %509 = vperm.xlu0 %508, %v463
        %v510 = vpop.permute.xlu0 %509
        %513 = vset.pattern.permute.xlu0 0
        %514 = vperm.xlu0 %513, %v464
        %v515 = vpop.permute.xlu0 %514
        %518 = vset.pattern.permute.xlu0 0
        %519 = vperm.xlu0 %518, %v465
        %v520 = vpop.permute.xlu0 %519
        %523 = vset.pattern.permute.xlu0 0
        %524 = vperm.xlu0 %523, %v466
        %v525 = vpop.permute.xlu0 %524
        %528 = vset.pattern.permute.xlu0 0
        %529 = vperm.xlu0 %528, %v467
        %v530 = vpop.permute.xlu0 %529
        %533 = vset.pattern.permute.xlu0 0
        %534 = vperm.xlu0 %533, %v468
        %v535 = vpop.permute.xlu0 %534
        %v547 = vunpack.c.l.b16 %v449
        %v548 = vunpack.c.h.b16 %v449
        %v549 = vunpack.c.l.b16 %v450
        %v550 = vunpack.c.h.b16 %v450
        %v551 = vunpack.c.l.b16 %v451
        %v552 = vunpack.c.h.b16 %v451
        %v553 = vunpack.c.l.b16 %v452
        %v554 = vunpack.c.h.b16 %v452
        %v555 = vunpack.c.l.b16 %v453
        %v556 = vunpack.c.h.b16 %v453
        %v557 = vunpack.c.l.b16 %v454
        %v558 = vunpack.c.h.b16 %v454
        %v559 = vunpack.c.l.b16 %v455
        %v560 = vunpack.c.h.b16 %v455
        %v561 = vunpack.c.l.b16 %v456
        %v562 = vunpack.c.h.b16 %v456
        %v563 = vunpack.c.l.b16 %v457
        %v564 = vunpack.c.h.b16 %v457
        %v565 = vunpack.c.l.b16 %v458
        %v566 = vunpack.c.h.b16 %v458
        %v567 = vpack.c.b16 %v549, %v547
        %v568 = vpack.c.b16 %v550, %v548
        %v569 = vpack.c.b16 %v553, %v551
        %v570 = vpack.c.b16 %v554, %v552
        %v571 = vpack.c.b16 %v557, %v555
        %v572 = vpack.c.b16 %v558, %v556
        %v573 = vpack.c.b16 %v561, %v559
        %v574 = vpack.c.b16 %v562, %v560
        %v575 = vpack.c.b16 %v565, %v563
        %v576 = vpack.c.b16 %v566, %v564
        %v600 = vunpack.c.l.b16 %v469
        %v601 = vunpack.c.h.b16 %v469
        %v602 = vunpack.c.l.b16 %v470
        %v603 = vunpack.c.h.b16 %v470
        %v604 = vunpack.c.l.b16 %v471
        %v605 = vunpack.c.h.b16 %v471
        %v606 = vunpack.c.l.b16 %v472
        %v607 = vunpack.c.h.b16 %v472
        %v608 = vunpack.c.l.b16 %v473
        %v609 = vunpack.c.h.b16 %v473
        %v610 = vunpack.c.l.b16 %v474
        %v611 = vunpack.c.h.b16 %v474
        %v612 = vunpack.c.l.b16 %v475
        %v613 = vunpack.c.h.b16 %v475
        %v614 = vunpack.c.l.b16 %v476
        %v615 = vunpack.c.h.b16 %v476
        %v616 = vunpack.c.l.b16 %v477
        %v617 = vunpack.c.h.b16 %v477
        %v618 = vunpack.c.l.b16 %v478
        %v619 = vunpack.c.h.b16 %v478
        %v620 = vunpack.c.l.b16 %v479
        %v621 = vunpack.c.h.b16 %v479
        %v622 = vunpack.c.l.b16 %v480
        %v623 = vunpack.c.h.b16 %v480
        %v624 = vunpack.c.l.b16 %v481
        %v625 = vunpack.c.h.b16 %v481
        %v626 = vunpack.c.l.b16 %v482
        %v627 = vunpack.c.h.b16 %v482
        %v628 = vunpack.c.l.b16 %v483
        %v629 = vunpack.c.h.b16 %v483
        %v630 = vunpack.c.l.b16 %v484
        %v631 = vunpack.c.h.b16 %v484
        %v632 = vunpack.c.l.b16 %v485
        %v633 = vunpack.c.h.b16 %v485
        %v634 = vunpack.c.l.b16 %v486
        %v635 = vunpack.c.h.b16 %v486
        %v636 = vpack.c.b16 %v602, %v600
        %v637 = vpack.c.b16 %v603, %v601
        %v638 = vpack.c.b16 %v606, %v604
        %v639 = vpack.c.b16 %v607, %v605
        %v640 = vpack.c.b16 %v610, %v608
        %v641 = vpack.c.b16 %v611, %v609
        %v642 = vpack.c.b16 %v614, %v612
        %v643 = vpack.c.b16 %v615, %v613
        %v644 = vpack.c.b16 %v618, %v616
        %v645 = vpack.c.b16 %v619, %v617
        %v646 = vpack.c.b16 %v622, %v620
        %v647 = vpack.c.b16 %v623, %v621
        %v648 = vpack.c.b16 %v626, %v624
        %v649 = vpack.c.b16 %v627, %v625
        %v650 = vpack.c.b16 %v630, %v628
        %v651 = vpack.c.b16 %v631, %v629
        %v652 = vpack.c.b16 %v634, %v632
        %v653 = vpack.c.b16 %v635, %v633
        %vm672 = vcmask 130048
        %v674 = vsel %vm672, %v568, 0
        %v677 = vsel %vm672, %v570, 0
        %v680 = vsel %vm672, %v572, 0
        %v683 = vsel %vm672, %v574, 0
        %v686 = vsel %vm672, %v576, 0
        %688 = vmatpush.bf16.msra.mxu0 %v650
        %689 = vmatpush.bf16.msra.mxu0 %v648
        %690 = vmatpush.bf16.msra.mxu0 %v646
        %691 = vmatpush.bf16.msra.mxu0 %v644
        %692 = vmatpush.bf16.msra.mxu0 %v642
        %693 = vmatpush.bf16.msra.mxu0 %v640
        %694 = vmatpush.bf16.msra.mxu0 %v638
        %695 = vmatpush.bf16.msra.mxu0 %v636
        %696 = vmatmul.bf16.gmra.mxu0 %v567
        %v697 = vpop.f32.mrf.mxu0
        %v698 = vadd.f32 %v490, %v697
        %v699 = vpop.f32.mrf.mxu0
        %v700 = vadd.f32 %v495, %v699
        %701 = vmatmul.bf16.gmra.mxu0 %v569
        %v702 = vpop.f32.mrf.mxu0
        %v703 = vadd.f32 %v500, %v702
        %v704 = vpop.f32.mrf.mxu0
        %v705 = vadd.f32 %v505, %v704
        %706 = vmatmul.bf16.gmra.mxu0 %v571
        %v707 = vpop.f32.mrf.mxu0
        %v708 = vadd.f32 %v510, %v707
        %v709 = vpop.f32.mrf.mxu0
        %v710 = vadd.f32 %v515, %v709
        %711 = vmatmul.bf16.gmra.mxu0 %v573
        %v712 = vpop.f32.mrf.mxu0
        %v713 = vadd.f32 %v520, %v712
        %v714 = vpop.f32.mrf.mxu0
        %v715 = vadd.f32 %v525, %v714
        %716 = vmatmul.bf16.gmra.mxu0 %v575
        %v717 = vpop.f32.mrf.mxu0
        %v718 = vadd.f32 %v530, %v717
        %v719 = vpop.f32.mrf.mxu0
        %v720 = vadd.f32 %v535, %v719
        %721 = vdwg.mxu0
        %722 = vmatpush.bf16.msra.mxu0 0
        %723 = vmatpush.bf16.msra.mxu0 0
        %724 = vmatpush.bf16.msra.mxu0 0
        %725 = vmatpush.bf16.msra.mxu0 0
        %726 = vmatpush.bf16.msra.mxu0 0
        %727 = vmatpush.bf16.msra.mxu0 0
        %728 = vmatpush.bf16.msra.mxu0 0
        %729 = vmatpush.bf16.msra.mxu0 %v652
        %730 = vmatmul.bf16.gmra.mxu0 %v674
        %v731 = vpop.f32.mrf.mxu0
        %v732 = vadd.f32 %v698, %v731
        %v733 = vpop.f32.mrf.mxu0
        %v734 = vadd.f32 %v700, %v733
        %735 = vmatmul.bf16.gmra.mxu0 %v677
        %v736 = vpop.f32.mrf.mxu0
        %v737 = vadd.f32 %v703, %v736
        %v738 = vpop.f32.mrf.mxu0
        %v739 = vadd.f32 %v705, %v738
        %740 = vmatmul.bf16.gmra.mxu0 %v680
        %v741 = vpop.f32.mrf.mxu0
        %v742 = vadd.f32 %v708, %v741
        %v743 = vpop.f32.mrf.mxu0
        %v744 = vadd.f32 %v710, %v743
        %745 = vmatmul.bf16.gmra.mxu0 %v683
        %v746 = vpop.f32.mrf.mxu0
        %v747 = vadd.f32 %v713, %v746
        %v748 = vpop.f32.mrf.mxu0
        %v749 = vadd.f32 %v715, %v748
        %750 = vmatmul.bf16.gmra.mxu0 %v686
        %v751 = vpop.f32.mrf.mxu0
        %v752 = vadd.f32 %v718, %v751
        %v753 = vpop.f32.mrf.mxu0
        %v754 = vadd.f32 %v720, %v753
        %755 = vdwg.mxu0
        %756 = vmatpush.bf16.msra.mxu0 %v651
        %757 = vmatpush.bf16.msra.mxu0 %v649
        %758 = vmatpush.bf16.msra.mxu0 %v647
        %759 = vmatpush.bf16.msra.mxu0 %v645
        %760 = vmatpush.bf16.msra.mxu0 %v643
        %761 = vmatpush.bf16.msra.mxu0 %v641
        %762 = vmatpush.bf16.msra.mxu0 %v639
        %763 = vmatpush.bf16.msra.mxu0 %v637
        %764 = vmatmul.bf16.gmra.mxu0 %v567
        %v765 = vpop.f32.mrf.mxu0
        %v766 = vadd.f32 %v490, %v765
        %v767 = vpop.f32.mrf.mxu0
        %v768 = vadd.f32 %v495, %v767
        %769 = vmatmul.bf16.gmra.mxu0 %v569
        %v770 = vpop.f32.mrf.mxu0
        %v771 = vadd.f32 %v500, %v770
        %v772 = vpop.f32.mrf.mxu0
        %v773 = vadd.f32 %v505, %v772
        %774 = vmatmul.bf16.gmra.mxu0 %v571
        %v775 = vpop.f32.mrf.mxu0
        %v776 = vadd.f32 %v510, %v775
        %v777 = vpop.f32.mrf.mxu0
        %v778 = vadd.f32 %v515, %v777
        %779 = vmatmul.bf16.gmra.mxu0 %v573
        %v780 = vpop.f32.mrf.mxu0
        %v781 = vadd.f32 %v520, %v780
        %v782 = vpop.f32.mrf.mxu0
        %v783 = vadd.f32 %v525, %v782
        %784 = vmatmul.bf16.gmra.mxu0 %v575
        %v785 = vpop.f32.mrf.mxu0
        %v786 = vadd.f32 %v530, %v785
        %v787 = vpop.f32.mrf.mxu0
        %v788 = vadd.f32 %v535, %v787
        %789 = vdwg.mxu0
        %790 = vmatpush.bf16.msra.mxu0 0
        %791 = vmatpush.bf16.msra.mxu0 0
        %792 = vmatpush.bf16.msra.mxu0 0
        %793 = vmatpush.bf16.msra.mxu0 0
        %794 = vmatpush.bf16.msra.mxu0 0
        %795 = vmatpush.bf16.msra.mxu0 0
        %796 = vmatpush.bf16.msra.mxu0 0
        %797 = vmatpush.bf16.msra.mxu0 %v653
        %798 = vmatmul.bf16.gmra.mxu0 %v674
        %v799 = vpop.f32.mrf.mxu0
        %v800 = vadd.f32 %v766, %v799
        %v801 = vpop.f32.mrf.mxu0
        %v802 = vadd.f32 %v768, %v801
        %803 = vmatmul.bf16.gmra.mxu0 %v677
        %v804 = vpop.f32.mrf.mxu0
        %v805 = vadd.f32 %v771, %v804
        %v806 = vpop.f32.mrf.mxu0
        %v807 = vadd.f32 %v773, %v806
        %808 = vmatmul.bf16.gmra.mxu0 %v680
        %v809 = vpop.f32.mrf.mxu0
        %v810 = vadd.f32 %v776, %v809
        %v811 = vpop.f32.mrf.mxu0
        %v812 = vadd.f32 %v778, %v811
        %813 = vmatmul.bf16.gmra.mxu0 %v683
        %v814 = vpop.f32.mrf.mxu0
        %v815 = vadd.f32 %v781, %v814
        %v816 = vpop.f32.mrf.mxu0
        %v817 = vadd.f32 %v783, %v816
        %818 = vmatmul.bf16.gmra.mxu0 %v686
        %v819 = vpop.f32.mrf.mxu0
        %v820 = vadd.f32 %v786, %v819
        %v821 = vpop.f32.mrf.mxu0
        %v822 = vadd.f32 %v788, %v821
        %823 = vdwg.mxu0
        %v824 = vmax.f32 %v732, 0.0
        %v825 = vmax.f32 %v800, 0.0
        %v826 = vmax.f32 %v734, 0.0
        %v827 = vmax.f32 %v802, 0.0
        %v828 = vmax.f32 %v737, 0.0
        %v829 = vmax.f32 %v805, 0.0
        %v830 = vmax.f32 %v739, 0.0
        %v831 = vmax.f32 %v807, 0.0
        %v832 = vmax.f32 %v742, 0.0
        %v833 = vmax.f32 %v810, 0.0
        %v834 = vmax.f32 %v744, 0.0
        %v835 = vmax.f32 %v812, 0.0
        %v836 = vmax.f32 %v747, 0.0
        %v837 = vmax.f32 %v815, 0.0
        %v838 = vmax.f32 %v749, 0.0
        %v839 = vmax.f32 %v817, 0.0
        %v840 = vmax.f32 %v752, 0.0
        %v841 = vmax.f32 %v820, 0.0
        %v842 = vmax.f32 %v754, 0.0
        %v843 = vmax.f32 %v822, 0.0
        %844 = vrot.lane.b32.xlu0 %v824, 17
        %v845 = vpop.permute.xlu0 %844
        %846 = vrot.lane.b32.xlu0 %v826, 17
        %v847 = vpop.permute.xlu0 %846
        %848 = vrot.lane.b32.xlu0 %v828, 17
        %v849 = vpop.permute.xlu0 %848
        %850 = vrot.lane.b32.xlu0 %v830, 17
        %v851 = vpop.permute.xlu0 %850
        %852 = vrot.lane.b32.xlu0 %v832, 17
        %v853 = vpop.permute.xlu0 %852
        %854 = vrot.lane.b32.xlu0 %v834, 17
        %v855 = vpop.permute.xlu0 %854
        %856 = vrot.lane.b32.xlu0 %v836, 17
        %v857 = vpop.permute.xlu0 %856
        %858 = vrot.lane.b32.xlu0 %v838, 17
        %v859 = vpop.permute.xlu0 %858
        %860 = vrot.lane.b32.xlu0 %v840, 17
        %v861 = vpop.permute.xlu0 %860
        %862 = vrot.lane.b32.xlu0 %v842, 17
        %v863 = vpop.permute.xlu0 %862
        %864 = vrot.lane.b32.xlu0 %v825, 17
        %v865 = vpop.permute.xlu0 %864
        %866 = vrot.lane.b32.xlu0 %v827, 17
        %v867 = vpop.permute.xlu0 %866
        %868 = vrot.lane.b32.xlu0 %v829, 17
        %v869 = vpop.permute.xlu0 %868
        %870 = vrot.lane.b32.xlu0 %v831, 17
        %v871 = vpop.permute.xlu0 %870
        %872 = vrot.lane.b32.xlu0 %v833, 17
        %v873 = vpop.permute.xlu0 %872
        %874 = vrot.lane.b32.xlu0 %v835, 17
        %v875 = vpop.permute.xlu0 %874
        %876 = vrot.lane.b32.xlu0 %v837, 17
        %v877 = vpop.permute.xlu0 %876
        %878 = vrot.lane.b32.xlu0 %v839, 17
        %v879 = vpop.permute.xlu0 %878
        %880 = vrot.lane.b32.xlu0 %v841, 17
        %v881 = vpop.permute.xlu0 %880
        %882 = vrot.lane.b32.xlu0 %v843, 17
        %v883 = vpop.permute.xlu0 %882
        %v884 = vsel %vm269, %v845, %v865
        %v885 = vsel %vm269, %v847, %v867
        %v886 = vsel %vm269, %v849, %v869
        %v887 = vsel %vm269, %v851, %v871
        %v888 = vsel %vm269, %v853, %v873
        %v889 = vsel %vm269, %v855, %v875
        %v890 = vsel %vm269, %v857, %v877
        %v891 = vsel %vm269, %v859, %v879
        %v892 = vsel %vm269, %v861, %v881
        %v893 = vsel %vm269, %v863, %v883
        %v894 = vsel %vm269, %v865, %v845
        %v895 = vsel %vm269, %v867, %v847
        %v896 = vsel %vm269, %v869, %v849
        %v897 = vsel %vm269, %v871, %v851
        %v898 = vsel %vm269, %v873, %v853
        %v899 = vsel %vm269, %v875, %v855
        %v900 = vsel %vm269, %v877, %v857
        %v901 = vsel %vm269, %v879, %v859
        %v902 = vsel %vm269, %v881, %v861
        %v903 = vsel %vm269, %v883, %v863
        %v904 = vmul.f32 %v894, %v274
        %v905 = vmul.f32 %v884, %v275
        %v906 = vmul.f32 %v895, %v274
        %v907 = vmul.f32 %v885, %v275
        %v908 = vmul.f32 %v896, %v274
        %v909 = vmul.f32 %v886, %v275
        %v910 = vmul.f32 %v897, %v274
        %v911 = vmul.f32 %v887, %v275
        %v912 = vmul.f32 %v898, %v274
        %v913 = vmul.f32 %v888, %v275
        %v914 = vmul.f32 %v899, %v274
        %v915 = vmul.f32 %v889, %v275
        %v916 = vmul.f32 %v900, %v274
        %v917 = vmul.f32 %v890, %v275
        %v918 = vmul.f32 %v901, %v274
        %v919 = vmul.f32 %v891, %v275
        %v920 = vmul.f32 %v902, %v274
        %v921 = vmul.f32 %v892, %v275
        %v922 = vmul.f32 %v903, %v274
        %v923 = vmul.f32 %v893, %v275
        %v924 = vpack.c.bf16 %v905, %v904
        %v925 = vpack.c.bf16 %v907, %v906
        %v926 = vpack.c.bf16 %v909, %v908
        %v927 = vpack.c.bf16 %v911, %v910
        %v928 = vpack.c.bf16 %v913, %v912
        %v929 = vpack.c.bf16 %v915, %v914
        %v930 = vpack.c.bf16 %v917, %v916
        %v931 = vpack.c.bf16 %v919, %v918
        %v932 = vpack.c.bf16 %v921, %v920
        %v933 = vpack.c.bf16 %v923, %v922
        %934 = vst [vmem:[#allocation3] sm:$0xff] %v924
        %935 = vst [vmem:[#allocation3 + $0x8] sm:$0xff] %v925
        %936 = vst [vmem:[#allocation3 + $0x10] sm:$0xff] %v926
        %937 = vst [vmem:[#allocation3 + $0x18] sm:$0xff] %v927
        %938 = vst [vmem:[#allocation3 + $0x20] sm:$0xff] %v928
        %939 = vst [vmem:[#allocation3 + $0x28] sm:$0xff] %v929
        %940 = vst [vmem:[#allocation3 + $0x30] sm:$0xff] %v930
        %941 = vst [vmem:[#allocation3 + $0x38] sm:$0xff] %v931
        %942 = vst [vmem:[#allocation3 + $0x40] sm:$0xff] %v932
        %943 = vst [vmem:[#allocation3 + $0x48] sm:$0xff] %v933
        %944 = vrot.lane.b32.xlu0 %v824, 16
        %v945 = vpop.permute.xlu0 %944
        %946 = vrot.lane.b32.xlu0 %v826, 16
        %v947 = vpop.permute.xlu0 %946
        %948 = vrot.lane.b32.xlu0 %v828, 16
        %v949 = vpop.permute.xlu0 %948
        %950 = vrot.lane.b32.xlu0 %v830, 16
        %v951 = vpop.permute.xlu0 %950
        %952 = vrot.lane.b32.xlu0 %v832, 16
        %v953 = vpop.permute.xlu0 %952
        %954 = vrot.lane.b32.xlu0 %v834, 16
        %v955 = vpop.permute.xlu0 %954
        %956 = vrot.lane.b32.xlu0 %v836, 16
        %v957 = vpop.permute.xlu0 %956
        %958 = vrot.lane.b32.xlu0 %v838, 16
        %v959 = vpop.permute.xlu0 %958
        %960 = vrot.lane.b32.xlu0 %v840, 16
        %v961 = vpop.permute.xlu0 %960
        %962 = vrot.lane.b32.xlu0 %v842, 16
        %v963 = vpop.permute.xlu0 %962
        %964 = vrot.lane.b32.xlu0 %v825, 16
        %v965 = vpop.permute.xlu0 %964
        %966 = vrot.lane.b32.xlu0 %v827, 16
        %v967 = vpop.permute.xlu0 %966
        %968 = vrot.lane.b32.xlu0 %v829, 16
        %v969 = vpop.permute.xlu0 %968
        %970 = vrot.lane.b32.xlu0 %v831, 16
        %v971 = vpop.permute.xlu0 %970
        %972 = vrot.lane.b32.xlu0 %v833, 16
        %v973 = vpop.permute.xlu0 %972
        %974 = vrot.lane.b32.xlu0 %v835, 16
        %v975 = vpop.permute.xlu0 %974
        %976 = vrot.lane.b32.xlu0 %v837, 16
        %v977 = vpop.permute.xlu0 %976
        %978 = vrot.lane.b32.xlu0 %v839, 16
        %v979 = vpop.permute.xlu0 %978
        %980 = vrot.lane.b32.xlu0 %v841, 16
        %v981 = vpop.permute.xlu0 %980
        %982 = vrot.lane.b32.xlu0 %v843, 16
        %v983 = vpop.permute.xlu0 %982
        %v984 = vsel %vm292, %v945, %v965
        %v985 = vsel %vm292, %v947, %v967
        %v986 = vsel %vm292, %v949, %v969
        %v987 = vsel %vm292, %v951, %v971
        %v988 = vsel %vm292, %v953, %v973
        %v989 = vsel %vm292, %v955, %v975
        %v990 = vsel %vm292, %v957, %v977
        %v991 = vsel %vm292, %v959, %v979
        %v992 = vsel %vm292, %v961, %v981
        %v993 = vsel %vm292, %v963, %v983
        %v994 = vsel %vm292, %v965, %v945
        %v995 = vsel %vm292, %v967, %v947
        %v996 = vsel %vm292, %v969, %v949
        %v997 = vsel %vm292, %v971, %v951
        %v998 = vsel %vm292, %v973, %v953
        %v999 = vsel %vm292, %v975, %v955
        %v1000 = vsel %vm292, %v977, %v957
        %v1001 = vsel %vm292, %v979, %v959
        %v1002 = vsel %vm292, %v981, %v961
        %v1003 = vsel %vm292, %v983, %v963
        %v1004 = vmul.f32 %v994, %v297
        %v1005 = vmul.f32 %v984, %v298
        %v1006 = vmul.f32 %v995, %v297
        %v1007 = vmul.f32 %v985, %v298
        %v1008 = vmul.f32 %v996, %v297
        %v1009 = vmul.f32 %v986, %v298
        %v1010 = vmul.f32 %v997, %v297
        %v1011 = vmul.f32 %v987, %v298
        %v1012 = vmul.f32 %v998, %v297
        %v1013 = vmul.f32 %v988, %v298
        %v1014 = vmul.f32 %v999, %v297
        %v1015 = vmul.f32 %v989, %v298
        %v1016 = vmul.f32 %v1000, %v297
        %v1017 = vmul.f32 %v990, %v298
        %v1018 = vmul.f32 %v1001, %v297
        %v1019 = vmul.f32 %v991, %v298
        %v1020 = vmul.f32 %v1002, %v297
        %v1021 = vmul.f32 %v992, %v298
        %v1022 = vmul.f32 %v1003, %v297
        %v1023 = vmul.f32 %v993, %v298
        %v1024 = vpack.c.bf16 %v1005, %v1004
        %v1025 = vpack.c.bf16 %v1007, %v1006
        %v1026 = vpack.c.bf16 %v1009, %v1008
        %v1027 = vpack.c.bf16 %v1011, %v1010
        %v1028 = vpack.c.bf16 %v1013, %v1012
        %v1029 = vpack.c.bf16 %v1015, %v1014
        %v1030 = vpack.c.bf16 %v1017, %v1016
        %v1031 = vpack.c.bf16 %v1019, %v1018
        %v1032 = vpack.c.bf16 %v1021, %v1020
        %v1033 = vpack.c.bf16 %v1023, %v1022
        %1034 = vst [vmem:[#allocation3 + $0x50] sm:$0xff] %v1024
        %1035 = vst [vmem:[#allocation3 + $0x58] sm:$0xff] %v1025
        %1036 = vst [vmem:[#allocation3 + $0x60] sm:$0xff] %v1026
        %1037 = vst [vmem:[#allocation3 + $0x68] sm:$0xff] %v1027
        %1038 = vst [vmem:[#allocation3 + $0x70] sm:$0xff] %v1028
        %1039 = vst [vmem:[#allocation3 + $0x78] sm:$0xff] %v1029
        %1040 = vst [vmem:[#allocation3 + $0x80] sm:$0xff] %v1030
        %1041 = vst [vmem:[#allocation3 + $0x88] sm:$0xff] %v1031
        %1042 = vst [vmem:[#allocation3 + $0x90] sm:$0xff] %v1032
        %1043 = vst [vmem:[#allocation3 + $0x98] sm:$0xff] %v1033
        %1044 = vrot.lane.b32.xlu0 %v824, 15
        %v1045 = vpop.permute.xlu0 %1044
        %1046 = vrot.lane.b32.xlu0 %v826, 15
        %v1047 = vpop.permute.xlu0 %1046
        %1048 = vrot.lane.b32.xlu0 %v828, 15
        %v1049 = vpop.permute.xlu0 %1048
        %1050 = vrot.lane.b32.xlu0 %v830, 15
        %v1051 = vpop.permute.xlu0 %1050
        %1052 = vrot.lane.b32.xlu0 %v832, 15
        %v1053 = vpop.permute.xlu0 %1052
        %1054 = vrot.lane.b32.xlu0 %v834, 15
        %v1055 = vpop.permute.xlu0 %1054
        %1056 = vrot.lane.b32.xlu0 %v836, 15
        %v1057 = vpop.permute.xlu0 %1056
        %1058 = vrot.lane.b32.xlu0 %v838, 15
        %v1059 = vpop.permute.xlu0 %1058
        %1060 = vrot.lane.b32.xlu0 %v840, 15
        %v1061 = vpop.permute.xlu0 %1060
        %1062 = vrot.lane.b32.xlu0 %v842, 15
        %v1063 = vpop.permute.xlu0 %1062
        %1064 = vrot.lane.b32.xlu0 %v825, 15
        %v1065 = vpop.permute.xlu0 %1064
        %1066 = vrot.lane.b32.xlu0 %v827, 15
        %v1067 = vpop.permute.xlu0 %1066
        %1068 = vrot.lane.b32.xlu0 %v829, 15
        %v1069 = vpop.permute.xlu0 %1068
        %1070 = vrot.lane.b32.xlu0 %v831, 15
        %v1071 = vpop.permute.xlu0 %1070
        %1072 = vrot.lane.b32.xlu0 %v833, 15
        %v1073 = vpop.permute.xlu0 %1072
        %1074 = vrot.lane.b32.xlu0 %v835, 15
        %v1075 = vpop.permute.xlu0 %1074
        %1076 = vrot.lane.b32.xlu0 %v837, 15
        %v1077 = vpop.permute.xlu0 %1076
        %1078 = vrot.lane.b32.xlu0 %v839, 15
        %v1079 = vpop.permute.xlu0 %1078
        %1080 = vrot.lane.b32.xlu0 %v841, 15
        %v1081 = vpop.permute.xlu0 %1080
        %1082 = vrot.lane.b32.xlu0 %v843, 15
        %v1083 = vpop.permute.xlu0 %1082
        %v1084 = vsel %vm315, %v1045, %v1065
        %v1085 = vsel %vm315, %v1047, %v1067
        %v1086 = vsel %vm315, %v1049, %v1069
        %v1087 = vsel %vm315, %v1051, %v1071
        %v1088 = vsel %vm315, %v1053, %v1073
        %v1089 = vsel %vm315, %v1055, %v1075
        %v1090 = vsel %vm315, %v1057, %v1077
        %v1091 = vsel %vm315, %v1059, %v1079
        %v1092 = vsel %vm315, %v1061, %v1081
        %v1093 = vsel %vm315, %v1063, %v1083
        %v1094 = vsel %vm315, %v1065, %v1045
        %v1095 = vsel %vm315, %v1067, %v1047
        %v1096 = vsel %vm315, %v1069, %v1049
        %v1097 = vsel %vm315, %v1071, %v1051
        %v1098 = vsel %vm315, %v1073, %v1053
        %v1099 = vsel %vm315, %v1075, %v1055
        %v1100 = vsel %vm315, %v1077, %v1057
        %v1101 = vsel %vm315, %v1079, %v1059
        %v1102 = vsel %vm315, %v1081, %v1061
        %v1103 = vsel %vm315, %v1083, %v1063
        %v1104 = vmul.f32 %v1094, %v320
        %v1105 = vmul.f32 %v1084, %v321
        %v1106 = vmul.f32 %v1095, %v320
        %v1107 = vmul.f32 %v1085, %v321
        %v1108 = vmul.f32 %v1096, %v320
        %v1109 = vmul.f32 %v1086, %v321
        %v1110 = vmul.f32 %v1097, %v320
        %v1111 = vmul.f32 %v1087, %v321
        %v1112 = vmul.f32 %v1098, %v320
        %v1113 = vmul.f32 %v1088, %v321
        %v1114 = vmul.f32 %v1099, %v320
        %v1115 = vmul.f32 %v1089, %v321
        %v1116 = vmul.f32 %v1100, %v320
        %v1117 = vmul.f32 %v1090, %v321
        %v1118 = vmul.f32 %v1101, %v320
        %v1119 = vmul.f32 %v1091, %v321
        %v1120 = vmul.f32 %v1102, %v320
        %v1121 = vmul.f32 %v1092, %v321
        %v1122 = vmul.f32 %v1103, %v320
        %v1123 = vmul.f32 %v1093, %v321
        %v1124 = vpack.c.bf16 %v1105, %v1104
        %v1125 = vpack.c.bf16 %v1107, %v1106
        %v1126 = vpack.c.bf16 %v1109, %v1108
        %v1127 = vpack.c.bf16 %v1111, %v1110
        %v1128 = vpack.c.bf16 %v1113, %v1112
        %v1129 = vpack.c.bf16 %v1115, %v1114
        %v1130 = vpack.c.bf16 %v1117, %v1116
        %v1131 = vpack.c.bf16 %v1119, %v1118
        %v1132 = vpack.c.bf16 %v1121, %v1120
        %v1133 = vpack.c.bf16 %v1123, %v1122
        %1134 = vst [vmem:[#allocation3 + $0xa0] sm:$0xff] %v1124
        %1135 = vst [vmem:[#allocation3 + $0xa8] sm:$0xff] %v1125
        %1136 = vst [vmem:[#allocation3 + $0xb0] sm:$0xff] %v1126
        %1137 = vst [vmem:[#allocation3 + $0xb8] sm:$0xff] %v1127
        %1138 = vst [vmem:[#allocation3 + $0xc0] sm:$0xff] %v1128
        %1139 = vst [vmem:[#allocation3 + $0xc8] sm:$0xff] %v1129
        %1140 = vst [vmem:[#allocation3 + $0xd0] sm:$0xff] %v1130
        %1141 = vst [vmem:[#allocation3 + $0xd8] sm:$0xff] %v1131
        %1142 = vst [vmem:[#allocation3 + $0xe0] sm:$0xff] %v1132
        %1143 = vst [vmem:[#allocation3 + $0xe8] sm:$0xff] %v1133
        %1144 = vrot.lane.b32.xlu0 %v824, 1
        %v1145 = vpop.permute.xlu0 %1144
        %1146 = vrot.lane.b32.xlu0 %v826, 1
        %v1147 = vpop.permute.xlu0 %1146
        %1148 = vrot.lane.b32.xlu0 %v828, 1
        %v1149 = vpop.permute.xlu0 %1148
        %1150 = vrot.lane.b32.xlu0 %v830, 1
        %v1151 = vpop.permute.xlu0 %1150
        %1152 = vrot.lane.b32.xlu0 %v832, 1
        %v1153 = vpop.permute.xlu0 %1152
        %1154 = vrot.lane.b32.xlu0 %v834, 1
        %v1155 = vpop.permute.xlu0 %1154
        %1156 = vrot.lane.b32.xlu0 %v836, 1
        %v1157 = vpop.permute.xlu0 %1156
        %1158 = vrot.lane.b32.xlu0 %v838, 1
        %v1159 = vpop.permute.xlu0 %1158
        %1160 = vrot.lane.b32.xlu0 %v840, 1
        %v1161 = vpop.permute.xlu0 %1160
        %1162 = vrot.lane.b32.xlu0 %v842, 1
        %v1163 = vpop.permute.xlu0 %1162
        %1164 = vrot.lane.b32.xlu0 %v825, 1
        %v1165 = vpop.permute.xlu0 %1164
        %1166 = vrot.lane.b32.xlu0 %v827, 1
        %v1167 = vpop.permute.xlu0 %1166
        %1168 = vrot.lane.b32.xlu0 %v829, 1
        %v1169 = vpop.permute.xlu0 %1168
        %1170 = vrot.lane.b32.xlu0 %v831, 1
        %v1171 = vpop.permute.xlu0 %1170
        %1172 = vrot.lane.b32.xlu0 %v833, 1
        %v1173 = vpop.permute.xlu0 %1172
        %1174 = vrot.lane.b32.xlu0 %v835, 1
        %v1175 = vpop.permute.xlu0 %1174
        %1176 = vrot.lane.b32.xlu0 %v837, 1
        %v1177 = vpop.permute.xlu0 %1176
        %1178 = vrot.lane.b32.xlu0 %v839, 1
        %v1179 = vpop.permute.xlu0 %1178
        %1180 = vrot.lane.b32.xlu0 %v841, 1
        %v1181 = vpop.permute.xlu0 %1180
        %1182 = vrot.lane.b32.xlu0 %v843, 1
        %v1183 = vpop.permute.xlu0 %1182
        %v1184 = vsel %vm338, %v1145, %v1165
        %v1185 = vsel %vm338, %v1147, %v1167
        %v1186 = vsel %vm338, %v1149, %v1169
        %v1187 = vsel %vm338, %v1151, %v1171
        %v1188 = vsel %vm338, %v1153, %v1173
        %v1189 = vsel %vm338, %v1155, %v1175
        %v1190 = vsel %vm338, %v1157, %v1177
        %v1191 = vsel %vm338, %v1159, %v1179
        %v1192 = vsel %vm338, %v1161, %v1181
        %v1193 = vsel %vm338, %v1163, %v1183
        %v1194 = vsel %vm338, %v1165, %v1145
        %v1195 = vsel %vm338, %v1167, %v1147
        %v1196 = vsel %vm338, %v1169, %v1149
        %v1197 = vsel %vm338, %v1171, %v1151
        %v1198 = vsel %vm338, %v1173, %v1153
        %v1199 = vsel %vm338, %v1175, %v1155
        %v1200 = vsel %vm338, %v1177, %v1157
        %v1201 = vsel %vm338, %v1179, %v1159
        %v1202 = vsel %vm338, %v1181, %v1161
        %v1203 = vsel %vm338, %v1183, %v1163
        %v1204 = vmul.f32 %v1194, %v343
        %v1205 = vmul.f32 %v1184, %v344
        %v1206 = vmul.f32 %v1195, %v343
        %v1207 = vmul.f32 %v1185, %v344
        %v1208 = vmul.f32 %v1196, %v343
        %v1209 = vmul.f32 %v1186, %v344
        %v1210 = vmul.f32 %v1197, %v343
        %v1211 = vmul.f32 %v1187, %v344
        %v1212 = vmul.f32 %v1198, %v343
        %v1213 = vmul.f32 %v1188, %v344
        %v1214 = vmul.f32 %v1199, %v343
        %v1215 = vmul.f32 %v1189, %v344
        %v1216 = vmul.f32 %v1200, %v343
        %v1217 = vmul.f32 %v1190, %v344
        %v1218 = vmul.f32 %v1201, %v343
        %v1219 = vmul.f32 %v1191, %v344
        %v1220 = vmul.f32 %v1202, %v343
        %v1221 = vmul.f32 %v1192, %v344
        %v1222 = vmul.f32 %v1203, %v343
        %v1223 = vmul.f32 %v1193, %v344
        %v1224 = vpack.c.bf16 %v1205, %v1204
        %v1225 = vpack.c.bf16 %v1207, %v1206
        %v1226 = vpack.c.bf16 %v1209, %v1208
        %v1227 = vpack.c.bf16 %v1211, %v1210
        %v1228 = vpack.c.bf16 %v1213, %v1212
        %v1229 = vpack.c.bf16 %v1215, %v1214
        %v1230 = vpack.c.bf16 %v1217, %v1216
        %v1231 = vpack.c.bf16 %v1219, %v1218
        %v1232 = vpack.c.bf16 %v1221, %v1220
        %v1233 = vpack.c.bf16 %v1223, %v1222
        %1234 = vst [vmem:[#allocation3 + $0xf0] sm:$0xff] %v1224
        %1235 = vst [vmem:[#allocation3 + $0xf8] sm:$0xff] %v1225
        %1236 = vst [vmem:[#allocation3 + $0x100] sm:$0xff] %v1226
        %1237 = vst [vmem:[#allocation3 + $0x108] sm:$0xff] %v1227
        %1238 = vst [vmem:[#allocation3 + $0x110] sm:$0xff] %v1228
        %1239 = vst [vmem:[#allocation3 + $0x118] sm:$0xff] %v1229
        %1240 = vst [vmem:[#allocation3 + $0x120] sm:$0xff] %v1230
        %1241 = vst [vmem:[#allocation3 + $0x128] sm:$0xff] %v1231
        %1242 = vst [vmem:[#allocation3 + $0x130] sm:$0xff] %v1232
        %1243 = vst [vmem:[#allocation3 + $0x138] sm:$0xff] %v1233
        %v1244 = vpack.c.bf16 %v825, %v824
        %v1245 = vpack.c.bf16 %v827, %v826
        %v1246 = vpack.c.bf16 %v829, %v828
        %v1247 = vpack.c.bf16 %v831, %v830
        %v1248 = vpack.c.bf16 %v833, %v832
        %v1249 = vpack.c.bf16 %v835, %v834
        %v1250 = vpack.c.bf16 %v837, %v836
        %v1251 = vpack.c.bf16 %v839, %v838
        %v1252 = vpack.c.bf16 %v841, %v840
        %v1253 = vpack.c.bf16 %v843, %v842
        %1254 = vst [vmem:[#allocation3 + $0x140] sm:$0xff] %v1244
        %1255 = vst [vmem:[#allocation3 + $0x148] sm:$0xff] %v1245
        %1256 = vst [vmem:[#allocation3 + $0x150] sm:$0xff] %v1246
        %1257 = vst [vmem:[#allocation3 + $0x158] sm:$0xff] %v1247
        %1258 = vst [vmem:[#allocation3 + $0x160] sm:$0xff] %v1248
        %1259 = vst [vmem:[#allocation3 + $0x168] sm:$0xff] %v1249
        %1260 = vst [vmem:[#allocation3 + $0x170] sm:$0xff] %v1250
        %1261 = vst [vmem:[#allocation3 + $0x178] sm:$0xff] %v1251
        %1262 = vst [vmem:[#allocation3 + $0x180] sm:$0xff] %v1252
        %1263 = vst [vmem:[#allocation3 + $0x188] sm:$0xff] %v1253
        %1264 = vrot.lane.b32.xlu0 %v824, 127
        %v1265 = vpop.permute.xlu0 %1264
        %1266 = vrot.lane.b32.xlu0 %v826, 127
        %v1267 = vpop.permute.xlu0 %1266
        %1268 = vrot.lane.b32.xlu0 %v828, 127
        %v1269 = vpop.permute.xlu0 %1268
        %1270 = vrot.lane.b32.xlu0 %v830, 127
        %v1271 = vpop.permute.xlu0 %1270
        %1272 = vrot.lane.b32.xlu0 %v832, 127
        %v1273 = vpop.permute.xlu0 %1272
        %1274 = vrot.lane.b32.xlu0 %v834, 127
        %v1275 = vpop.permute.xlu0 %1274
        %1276 = vrot.lane.b32.xlu0 %v836, 127
        %v1277 = vpop.permute.xlu0 %1276
        %1278 = vrot.lane.b32.xlu0 %v838, 127
        %v1279 = vpop.permute.xlu0 %1278
        %1280 = vrot.lane.b32.xlu0 %v840, 127
        %v1281 = vpop.permute.xlu0 %1280
        %1282 = vrot.lane.b32.xlu0 %v842, 127
        %v1283 = vpop.permute.xlu0 %1282
        %1284 = vrot.lane.b32.xlu0 %v825, 127
        %v1285 = vpop.permute.xlu0 %1284
        %1286 = vrot.lane.b32.xlu0 %v827, 127
        %v1287 = vpop.permute.xlu0 %1286
        %1288 = vrot.lane.b32.xlu0 %v829, 127
        %v1289 = vpop.permute.xlu0 %1288
        %1290 = vrot.lane.b32.xlu0 %v831, 127
        %v1291 = vpop.permute.xlu0 %1290
        %1292 = vrot.lane.b32.xlu0 %v833, 127
        %v1293 = vpop.permute.xlu0 %1292
        %1294 = vrot.lane.b32.xlu0 %v835, 127
        %v1295 = vpop.permute.xlu0 %1294
        %1296 = vrot.lane.b32.xlu0 %v837, 127
        %v1297 = vpop.permute.xlu0 %1296
        %1298 = vrot.lane.b32.xlu0 %v839, 127
        %v1299 = vpop.permute.xlu0 %1298
        %1300 = vrot.lane.b32.xlu0 %v841, 127
        %v1301 = vpop.permute.xlu0 %1300
        %1302 = vrot.lane.b32.xlu0 %v843, 127
        %v1303 = vpop.permute.xlu0 %1302
        %v1304 = vsel %vm365, %v1265, %v1285
        %v1305 = vsel %vm365, %v1267, %v1287
        %v1306 = vsel %vm365, %v1269, %v1289
        %v1307 = vsel %vm365, %v1271, %v1291
        %v1308 = vsel %vm365, %v1273, %v1293
        %v1309 = vsel %vm365, %v1275, %v1295
        %v1310 = vsel %vm365, %v1277, %v1297
        %v1311 = vsel %vm365, %v1279, %v1299
        %v1312 = vsel %vm365, %v1281, %v1301
        %v1313 = vsel %vm365, %v1283, %v1303
        %v1314 = vsel %vm365, %v1285, %v1265
        %v1315 = vsel %vm365, %v1287, %v1267
        %v1316 = vsel %vm365, %v1289, %v1269
        %v1317 = vsel %vm365, %v1291, %v1271
        %v1318 = vsel %vm365, %v1293, %v1273
        %v1319 = vsel %vm365, %v1295, %v1275
        %v1320 = vsel %vm365, %v1297, %v1277
        %v1321 = vsel %vm365, %v1299, %v1279
        %v1322 = vsel %vm365, %v1301, %v1281
        %v1323 = vsel %vm365, %v1303, %v1283
        %v1324 = vmul.f32 %v1304, %v370
        %v1325 = vmul.f32 %v1314, %v371
        %v1326 = vmul.f32 %v1305, %v370
        %v1327 = vmul.f32 %v1315, %v371
        %v1328 = vmul.f32 %v1306, %v370
        %v1329 = vmul.f32 %v1316, %v371
        %v1330 = vmul.f32 %v1307, %v370
        %v1331 = vmul.f32 %v1317, %v371
        %v1332 = vmul.f32 %v1308, %v370
        %v1333 = vmul.f32 %v1318, %v371
        %v1334 = vmul.f32 %v1309, %v370
        %v1335 = vmul.f32 %v1319, %v371
        %v1336 = vmul.f32 %v1310, %v370
        %v1337 = vmul.f32 %v1320, %v371
        %v1338 = vmul.f32 %v1311, %v370
        %v1339 = vmul.f32 %v1321, %v371
        %v1340 = vmul.f32 %v1312, %v370
        %v1341 = vmul.f32 %v1322, %v371
        %v1342 = vmul.f32 %v1313, %v370
        %v1343 = vmul.f32 %v1323, %v371
        %v1344 = vpack.c.bf16 %v1325, %v1324
        %v1345 = vpack.c.bf16 %v1327, %v1326
        %v1346 = vpack.c.bf16 %v1329, %v1328
        %v1347 = vpack.c.bf16 %v1331, %v1330
        %v1348 = vpack.c.bf16 %v1333, %v1332
        %v1349 = vpack.c.bf16 %v1335, %v1334
        %v1350 = vpack.c.bf16 %v1337, %v1336
        %v1351 = vpack.c.bf16 %v1339, %v1338
        %v1352 = vpack.c.bf16 %v1341, %v1340
        %v1353 = vpack.c.bf16 %v1343, %v1342
        %1354 = vst [vmem:[#allocation3 + $0x190] sm:$0xff] %v1344
        %1355 = vst [vmem:[#allocation3 + $0x198] sm:$0xff] %v1345
        %1356 = vst [vmem:[#allocation3 + $0x1a0] sm:$0xff] %v1346
        %1357 = vst [vmem:[#allocation3 + $0x1a8] sm:$0xff] %v1347
        %1358 = vst [vmem:[#allocation3 + $0x1b0] sm:$0xff] %v1348
        %1359 = vst [vmem:[#allocation3 + $0x1b8] sm:$0xff] %v1349
        %1360 = vst [vmem:[#allocation3 + $0x1c0] sm:$0xff] %v1350
        %1361 = vst [vmem:[#allocation3 + $0x1c8] sm:$0xff] %v1351
        %1362 = vst [vmem:[#allocation3 + $0x1d0] sm:$0xff] %v1352
        %1363 = vst [vmem:[#allocation3 + $0x1d8] sm:$0xff] %v1353
        %1364 = vrot.lane.b32.xlu0 %v824, 113
        %v1365 = vpop.permute.xlu0 %1364
        %1366 = vrot.lane.b32.xlu0 %v826, 113
        %v1367 = vpop.permute.xlu0 %1366
        %1368 = vrot.lane.b32.xlu0 %v828, 113
        %v1369 = vpop.permute.xlu0 %1368
        %1370 = vrot.lane.b32.xlu0 %v830, 113
        %v1371 = vpop.permute.xlu0 %1370
        %1372 = vrot.lane.b32.xlu0 %v832, 113
        %v1373 = vpop.permute.xlu0 %1372
        %1374 = vrot.lane.b32.xlu0 %v834, 113
        %v1375 = vpop.permute.xlu0 %1374
        %1376 = vrot.lane.b32.xlu0 %v836, 113
        %v1377 = vpop.permute.xlu0 %1376
        %1378 = vrot.lane.b32.xlu0 %v838, 113
        %v1379 = vpop.permute.xlu0 %1378
        %1380 = vrot.lane.b32.xlu0 %v840, 113
        %v1381 = vpop.permute.xlu0 %1380
        %1382 = vrot.lane.b32.xlu0 %v842, 113
        %v1383 = vpop.permute.xlu0 %1382
        %1384 = vrot.lane.b32.xlu0 %v825, 113
        %v1385 = vpop.permute.xlu0 %1384
        %1386 = vrot.lane.b32.xlu0 %v827, 113
        %v1387 = vpop.permute.xlu0 %1386
        %1388 = vrot.lane.b32.xlu0 %v829, 113
        %v1389 = vpop.permute.xlu0 %1388
        %1390 = vrot.lane.b32.xlu0 %v831, 113
        %v1391 = vpop.permute.xlu0 %1390
        %1392 = vrot.lane.b32.xlu0 %v833, 113
        %v1393 = vpop.permute.xlu0 %1392
        %1394 = vrot.lane.b32.xlu0 %v835, 113
        %v1395 = vpop.permute.xlu0 %1394
        %1396 = vrot.lane.b32.xlu0 %v837, 113
        %v1397 = vpop.permute.xlu0 %1396
        %1398 = vrot.lane.b32.xlu0 %v839, 113
        %v1399 = vpop.permute.xlu0 %1398
        %1400 = vrot.lane.b32.xlu0 %v841, 113
        %v1401 = vpop.permute.xlu0 %1400
        %1402 = vrot.lane.b32.xlu0 %v843, 113
        %v1403 = vpop.permute.xlu0 %1402
        %v1404 = vsel %vm388, %v1365, %v1385
        %v1405 = vsel %vm388, %v1367, %v1387
        %v1406 = vsel %vm388, %v1369, %v1389
        %v1407 = vsel %vm388, %v1371, %v1391
        %v1408 = vsel %vm388, %v1373, %v1393
        %v1409 = vsel %vm388, %v1375, %v1395
        %v1410 = vsel %vm388, %v1377, %v1397
        %v1411 = vsel %vm388, %v1379, %v1399
        %v1412 = vsel %vm388, %v1381, %v1401
        %v1413 = vsel %vm388, %v1383, %v1403
        %v1414 = vsel %vm388, %v1385, %v1365
        %v1415 = vsel %vm388, %v1387, %v1367
        %v1416 = vsel %vm388, %v1389, %v1369
        %v1417 = vsel %vm388, %v1391, %v1371
        %v1418 = vsel %vm388, %v1393, %v1373
        %v1419 = vsel %vm388, %v1395, %v1375
        %v1420 = vsel %vm388, %v1397, %v1377
        %v1421 = vsel %vm388, %v1399, %v1379
        %v1422 = vsel %vm388, %v1401, %v1381
        %v1423 = vsel %vm388, %v1403, %v1383
        %v1424 = vmul.f32 %v1404, %v393
        %v1425 = vmul.f32 %v1414, %v394
        %v1426 = vmul.f32 %v1405, %v393
        %v1427 = vmul.f32 %v1415, %v394
        %v1428 = vmul.f32 %v1406, %v393
        %v1429 = vmul.f32 %v1416, %v394
        %v1430 = vmul.f32 %v1407, %v393
        %v1431 = vmul.f32 %v1417, %v394
        %v1432 = vmul.f32 %v1408, %v393
        %v1433 = vmul.f32 %v1418, %v394
        %v1434 = vmul.f32 %v1409, %v393
        %v1435 = vmul.f32 %v1419, %v394
        %v1436 = vmul.f32 %v1410, %v393
        %v1437 = vmul.f32 %v1420, %v394
        %v1438 = vmul.f32 %v1411, %v393
        %v1439 = vmul.f32 %v1421, %v394
        %v1440 = vmul.f32 %v1412, %v393
        %v1441 = vmul.f32 %v1422, %v394
        %v1442 = vmul.f32 %v1413, %v393
        %v1443 = vmul.f32 %v1423, %v394
        %v1444 = vpack.c.bf16 %v1425, %v1424
        %v1445 = vpack.c.bf16 %v1427, %v1426
        %v1446 = vpack.c.bf16 %v1429, %v1428
        %v1447 = vpack.c.bf16 %v1431, %v1430
        %v1448 = vpack.c.bf16 %v1433, %v1432
        %v1449 = vpack.c.bf16 %v1435, %v1434
        %v1450 = vpack.c.bf16 %v1437, %v1436
        %v1451 = vpack.c.bf16 %v1439, %v1438
        %v1452 = vpack.c.bf16 %v1441, %v1440
        %v1453 = vpack.c.bf16 %v1443, %v1442
        %1454 = vst [vmem:[#allocation3 + $0x1e0] sm:$0xff] %v1444
        %1455 = vst [vmem:[#allocation3 + $0x1e8] sm:$0xff] %v1445
        %1456 = vst [vmem:[#allocation3 + $0x1f0] sm:$0xff] %v1446
        %1457 = vst [vmem:[#allocation3 + $0x1f8] sm:$0xff] %v1447
        %1458 = vst [vmem:[#allocation3 + $0x200] sm:$0xff] %v1448
        %1459 = vst [vmem:[#allocation3 + $0x208] sm:$0xff] %v1449
        %1460 = vst [vmem:[#allocation3 + $0x210] sm:$0xff] %v1450
        %1461 = vst [vmem:[#allocation3 + $0x218] sm:$0xff] %v1451
        %1462 = vst [vmem:[#allocation3 + $0x220] sm:$0xff] %v1452
        %1463 = vst [vmem:[#allocation3 + $0x228] sm:$0xff] %v1453
        %1464 = vrot.lane.b32.xlu0 %v824, 112
        %v1465 = vpop.permute.xlu0 %1464
        %1466 = vrot.lane.b32.xlu0 %v826, 112
        %v1467 = vpop.permute.xlu0 %1466
        %1468 = vrot.lane.b32.xlu0 %v828, 112
        %v1469 = vpop.permute.xlu0 %1468
        %1470 = vrot.lane.b32.xlu0 %v830, 112
        %v1471 = vpop.permute.xlu0 %1470
        %1472 = vrot.lane.b32.xlu0 %v832, 112
        %v1473 = vpop.permute.xlu0 %1472
        %1474 = vrot.lane.b32.xlu0 %v834, 112
        %v1475 = vpop.permute.xlu0 %1474
        %1476 = vrot.lane.b32.xlu0 %v836, 112
        %v1477 = vpop.permute.xlu0 %1476
        %1478 = vrot.lane.b32.xlu0 %v838, 112
        %v1479 = vpop.permute.xlu0 %1478
        %1480 = vrot.lane.b32.xlu0 %v840, 112
        %v1481 = vpop.permute.xlu0 %1480
        %1482 = vrot.lane.b32.xlu0 %v842, 112
        %v1483 = vpop.permute.xlu0 %1482
        %1484 = vrot.lane.b32.xlu0 %v825, 112
        %v1485 = vpop.permute.xlu0 %1484
        %1486 = vrot.lane.b32.xlu0 %v827, 112
        %v1487 = vpop.permute.xlu0 %1486
        %1488 = vrot.lane.b32.xlu0 %v829, 112
        %v1489 = vpop.permute.xlu0 %1488
        %1490 = vrot.lane.b32.xlu0 %v831, 112
        %v1491 = vpop.permute.xlu0 %1490
        %1492 = vrot.lane.b32.xlu0 %v833, 112
        %v1493 = vpop.permute.xlu0 %1492
        %1494 = vrot.lane.b32.xlu0 %v835, 112
        %v1495 = vpop.permute.xlu0 %1494
        %1496 = vrot.lane.b32.xlu0 %v837, 112
        %v1497 = vpop.permute.xlu0 %1496
        %1498 = vrot.lane.b32.xlu0 %v839, 112
        %v1499 = vpop.permute.xlu0 %1498
        %1500 = vrot.lane.b32.xlu0 %v841, 112
        %v1501 = vpop.permute.xlu0 %1500
        %1502 = vrot.lane.b32.xlu0 %v843, 112
        %v1503 = vpop.permute.xlu0 %1502
        %v1504 = vsel %vm411, %v1465, %v1485
        %v1505 = vsel %vm411, %v1467, %v1487
        %v1506 = vsel %vm411, %v1469, %v1489
        %v1507 = vsel %vm411, %v1471, %v1491
        %v1508 = vsel %vm411, %v1473, %v1493
        %v1509 = vsel %vm411, %v1475, %v1495
        %v1510 = vsel %vm411, %v1477, %v1497
        %v1511 = vsel %vm411, %v1479, %v1499
        %v1512 = vsel %vm411, %v1481, %v1501
        %v1513 = vsel %vm411, %v1483, %v1503
        %v1514 = vsel %vm411, %v1485, %v1465
        %v1515 = vsel %vm411, %v1487, %v1467
        %v1516 = vsel %vm411, %v1489, %v1469
        %v1517 = vsel %vm411, %v1491, %v1471
        %v1518 = vsel %vm411, %v1493, %v1473
        %v1519 = vsel %vm411, %v1495, %v1475
        %v1520 = vsel %vm411, %v1497, %v1477
        %v1521 = vsel %vm411, %v1499, %v1479
        %v1522 = vsel %vm411, %v1501, %v1481
        %v1523 = vsel %vm411, %v1503, %v1483
        %v1524 = vmul.f32 %v1504, %v416
        %v1525 = vmul.f32 %v1514, %v417
        %v1526 = vmul.f32 %v1505, %v416
        %v1527 = vmul.f32 %v1515, %v417
        %v1528 = vmul.f32 %v1506, %v416
        %v1529 = vmul.f32 %v1516, %v417
        %v1530 = vmul.f32 %v1507, %v416
        %v1531 = vmul.f32 %v1517, %v417
        %v1532 = vmul.f32 %v1508, %v416
        %v1533 = vmul.f32 %v1518, %v417
        %v1534 = vmul.f32 %v1509, %v416
        %v1535 = vmul.f32 %v1519, %v417
        %v1536 = vmul.f32 %v1510, %v416
        %v1537 = vmul.f32 %v1520, %v417
        %v1538 = vmul.f32 %v1511, %v416
        %v1539 = vmul.f32 %v1521, %v417
        %v1540 = vmul.f32 %v1512, %v416
        %v1541 = vmul.f32 %v1522, %v417
        %v1542 = vmul.f32 %v1513, %v416
        %v1543 = vmul.f32 %v1523, %v417
        %v1544 = vpack.c.bf16 %v1525, %v1524
        %v1545 = vpack.c.bf16 %v1527, %v1526
        %v1546 = vpack.c.bf16 %v1529, %v1528
        %v1547 = vpack.c.bf16 %v1531, %v1530
        %v1548 = vpack.c.bf16 %v1533, %v1532
        %v1549 = vpack.c.bf16 %v1535, %v1534
        %v1550 = vpack.c.bf16 %v1537, %v1536
        %v1551 = vpack.c.bf16 %v1539, %v1538
        %v1552 = vpack.c.bf16 %v1541, %v1540
        %v1553 = vpack.c.bf16 %v1543, %v1542
        %1554 = vst [vmem:[#allocation3 + $0x230] sm:$0xff] %v1544
        %1555 = vst [vmem:[#allocation3 + $0x238] sm:$0xff] %v1545
        %1556 = vst [vmem:[#allocation3 + $0x240] sm:$0xff] %v1546
        %1557 = vst [vmem:[#allocation3 + $0x248] sm:$0xff] %v1547
        %1558 = vst [vmem:[#allocation3 + $0x250] sm:$0xff] %v1548
        %1559 = vst [vmem:[#allocation3 + $0x258] sm:$0xff] %v1549
        %1560 = vst [vmem:[#allocation3 + $0x260] sm:$0xff] %v1550
        %1561 = vst [vmem:[#allocation3 + $0x268] sm:$0xff] %v1551
        %1562 = vst [vmem:[#allocation3 + $0x270] sm:$0xff] %v1552
        %1563 = vst [vmem:[#allocation3 + $0x278] sm:$0xff] %v1553
        %1564 = vrot.lane.b32.xlu0 %v824, 111
        %v1565 = vpop.permute.xlu0 %1564
        %1566 = vrot.lane.b32.xlu0 %v826, 111
        %v1567 = vpop.permute.xlu0 %1566
        %1568 = vrot.lane.b32.xlu0 %v828, 111
        %v1569 = vpop.permute.xlu0 %1568
        %1570 = vrot.lane.b32.xlu0 %v830, 111
        %v1571 = vpop.permute.xlu0 %1570
        %1572 = vrot.lane.b32.xlu0 %v832, 111
        %v1573 = vpop.permute.xlu0 %1572
        %1574 = vrot.lane.b32.xlu0 %v834, 111
        %v1575 = vpop.permute.xlu0 %1574
        %1576 = vrot.lane.b32.xlu0 %v836, 111
        %v1577 = vpop.permute.xlu0 %1576
        %1578 = vrot.lane.b32.xlu0 %v838, 111
        %v1579 = vpop.permute.xlu0 %1578
        %1580 = vrot.lane.b32.xlu0 %v840, 111
        %v1581 = vpop.permute.xlu0 %1580
        %1582 = vrot.lane.b32.xlu0 %v842, 111
        %v1583 = vpop.permute.xlu0 %1582
        %1584 = vrot.lane.b32.xlu0 %v825, 111
        %v1585 = vpop.permute.xlu0 %1584
        %1586 = vrot.lane.b32.xlu0 %v827, 111
        %v1587 = vpop.permute.xlu0 %1586
        %1588 = vrot.lane.b32.xlu0 %v829, 111
        %v1589 = vpop.permute.xlu0 %1588
        %1590 = vrot.lane.b32.xlu0 %v831, 111
        %v1591 = vpop.permute.xlu0 %1590
        %1592 = vrot.lane.b32.xlu0 %v833, 111
        %v1593 = vpop.permute.xlu0 %1592
        %1594 = vrot.lane.b32.xlu0 %v835, 111
        %v1595 = vpop.permute.xlu0 %1594
        %1596 = vrot.lane.b32.xlu0 %v837, 111
        %v1597 = vpop.permute.xlu0 %1596
        %1598 = vrot.lane.b32.xlu0 %v839, 111
        %v1599 = vpop.permute.xlu0 %1598
        %1600 = vrot.lane.b32.xlu0 %v841, 111
        %v1601 = vpop.permute.xlu0 %1600
        %1602 = vrot.lane.b32.xlu0 %v843, 111
        %v1603 = vpop.permute.xlu0 %1602
        %v1604 = vsel %vm434, %v1565, %v1585
        %v1605 = vsel %vm434, %v1567, %v1587
        %v1606 = vsel %vm434, %v1569, %v1589
        %v1607 = vsel %vm434, %v1571, %v1591
        %v1608 = vsel %vm434, %v1573, %v1593
        %v1609 = vsel %vm434, %v1575, %v1595
        %v1610 = vsel %vm434, %v1577, %v1597
        %v1611 = vsel %vm434, %v1579, %v1599
        %v1612 = vsel %vm434, %v1581, %v1601
        %v1613 = vsel %vm434, %v1583, %v1603
        %v1614 = vsel %vm434, %v1585, %v1565
        %v1615 = vsel %vm434, %v1587, %v1567
        %v1616 = vsel %vm434, %v1589, %v1569
        %v1617 = vsel %vm434, %v1591, %v1571
        %v1618 = vsel %vm434, %v1593, %v1573
        %v1619 = vsel %vm434, %v1595, %v1575
        %v1620 = vsel %vm434, %v1597, %v1577
        %v1621 = vsel %vm434, %v1599, %v1579
        %v1622 = vsel %vm434, %v1601, %v1581
        %v1623 = vsel %vm434, %v1603, %v1583
        %v1624 = vmul.f32 %v1604, %v439
        %v1625 = vmul.f32 %v1614, %v440
        %v1626 = vmul.f32 %v1605, %v439
        %v1627 = vmul.f32 %v1615, %v440
        %v1628 = vmul.f32 %v1606, %v439
        %v1629 = vmul.f32 %v1616, %v440
        %v1630 = vmul.f32 %v1607, %v439
        %v1631 = vmul.f32 %v1617, %v440
        %v1632 = vmul.f32 %v1608, %v439
        %v1633 = vmul.f32 %v1618, %v440
        %v1634 = vmul.f32 %v1609, %v439
        %v1635 = vmul.f32 %v1619, %v440
        %v1636 = vmul.f32 %v1610, %v439
        %v1637 = vmul.f32 %v1620, %v440
        %v1638 = vmul.f32 %v1611, %v439
        %v1639 = vmul.f32 %v1621, %v440
        %v1640 = vmul.f32 %v1612, %v439
        %v1641 = vmul.f32 %v1622, %v440
        %v1642 = vmul.f32 %v1613, %v439
        %v1643 = vmul.f32 %v1623, %v440
        %v1644 = vpack.c.bf16 %v1625, %v1624
        %v1645 = vpack.c.bf16 %v1627, %v1626
        %v1646 = vpack.c.bf16 %v1629, %v1628
        %v1647 = vpack.c.bf16 %v1631, %v1630
        %v1648 = vpack.c.bf16 %v1633, %v1632
        %v1649 = vpack.c.bf16 %v1635, %v1634
        %v1650 = vpack.c.bf16 %v1637, %v1636
        %v1651 = vpack.c.bf16 %v1639, %v1638
        %v1652 = vpack.c.bf16 %v1641, %v1640
        %v1653 = vpack.c.bf16 %v1643, %v1642
        %1654 = vst [vmem:[#allocation3 + $0x280] sm:$0xff] %v1644
        %1655 = vst [vmem:[#allocation3 + $0x288] sm:$0xff] %v1645
        %1656 = vst [vmem:[#allocation3 + $0x290] sm:$0xff] %v1646
        %1657 = vst [vmem:[#allocation3 + $0x298] sm:$0xff] %v1647
        %1658 = vst [vmem:[#allocation3 + $0x2a0] sm:$0xff] %v1648
        %1659 = vst [vmem:[#allocation3 + $0x2a8] sm:$0xff] %v1649
        %1660 = vst [vmem:[#allocation3 + $0x2b0] sm:$0xff] %v1650
        %1661 = vst [vmem:[#allocation3 + $0x2b8] sm:$0xff] %v1651
        %1662 = vst [vmem:[#allocation3 + $0x2c0] sm:$0xff] %v1652
        %1663 = vst [vmem:[#allocation3 + $0x2c8] sm:$0xff] %v1653
        %v1664 = vld [vmem:[%s4] sm:$0xff]
        %v1665 = vld [vmem:[%s4 + $0x8] sm:$0xff]
        %v1666 = vld [vmem:[%s4 + $0x10] sm:$0xff]
        %v1667 = vld [vmem:[%s4 + $0x18] sm:$0xff]
        %v1668 = vld [vmem:[%s4 + $0x20] sm:$0xff]
        %v1669 = vld [vmem:[%s4 + $0x28] sm:$0xff]
        %v1670 = vld [vmem:[%s5] sm:$0xff]
        %v1671 = vld [vmem:[%s5 + $0x8] sm:$0xff]
        %v1672 = vld [vmem:[#allocation3] sm:$0xff]
        %v1673 = vld [vmem:[#allocation3 + $0x8] sm:$0xff]
        %v1674 = vld [vmem:[#allocation3 + $0x10] sm:$0xff]
        %v1675 = vld [vmem:[#allocation3 + $0x18] sm:$0xff]
        %v1676 = vld [vmem:[#allocation3 + $0x20] sm:$0xff]
        %v1677 = vld [vmem:[#allocation3 + $0x28] sm:$0xff]
        %v1678 = vld [vmem:[#allocation3 + $0x30] sm:$0xff]
        %v1679 = vld [vmem:[#allocation3 + $0x38] sm:$0xff]
        %v1680 = vld [vmem:[#allocation3 + $0x40] sm:$0xff]
        %v1681 = vld [vmem:[#allocation3 + $0x48] sm:$0xff]
        %v1682 = vld [vmem:[#allocation3 + $0x50] sm:$0xff]
        %v1683 = vld [vmem:[#allocation3 + $0x58] sm:$0xff]
        %v1684 = vld [vmem:[#allocation3 + $0x60] sm:$0xff]
        %v1685 = vld [vmem:[#allocation3 + $0x68] sm:$0xff]
        %v1686 = vld [vmem:[#allocation3 + $0x70] sm:$0xff]
        %v1687 = vld [vmem:[#allocation3 + $0x78] sm:$0xff]
        %v1688 = vld [vmem:[#allocation3 + $0x80] sm:$0xff]
        %v1689 = vld [vmem:[#allocation3 + $0x88] sm:$0xff]
        %v1690 = vld [vmem:[#allocation3 + $0x90] sm:$0xff]
        %v1691 = vld [vmem:[#allocation3 + $0x98] sm:$0xff]
        %v1692 = vld [vmem:[#allocation3 + $0xa0] sm:$0xff]
        %v1693 = vld [vmem:[#allocation3 + $0xa8] sm:$0xff]
        %v1694 = vld [vmem:[#allocation3 + $0xb0] sm:$0xff]
        %v1695 = vld [vmem:[#allocation3 + $0xb8] sm:$0xff]
        %v1696 = vld [vmem:[#allocation3 + $0xc0] sm:$0xff]
        %v1697 = vld [vmem:[#allocation3 + $0xc8] sm:$0xff]
        %v1698 = vld [vmem:[#allocation3 + $0xd0] sm:$0xff]
        %v1699 = vld [vmem:[#allocation3 + $0xd8] sm:$0xff]
        %v1700 = vld [vmem:[#allocation3 + $0xe0] sm:$0xff]
        %v1701 = vld [vmem:[#allocation3 + $0xe8] sm:$0xff]
        %v1702 = vld [vmem:[#allocation3 + $0xf0] sm:$0xff]
        %v1703 = vld [vmem:[#allocation3 + $0xf8] sm:$0xff]
        %v1704 = vld [vmem:[#allocation3 + $0x100] sm:$0xff]
        %v1705 = vld [vmem:[#allocation3 + $0x108] sm:$0xff]
        %v1706 = vld [vmem:[#allocation3 + $0x110] sm:$0xff]
        %v1707 = vld [vmem:[#allocation3 + $0x118] sm:$0xff]
        %v1708 = vld [vmem:[#allocation3 + $0x120] sm:$0xff]
        %v1709 = vld [vmem:[#allocation3 + $0x128] sm:$0xff]
        %v1710 = vld [vmem:[#allocation3 + $0x130] sm:$0xff]
        %v1711 = vld [vmem:[#allocation3 + $0x138] sm:$0xff]
        %v1712 = vld [vmem:[#allocation3 + $0x140] sm:$0xff]
        %v1713 = vld [vmem:[#allocation3 + $0x148] sm:$0xff]
        %v1714 = vld [vmem:[#allocation3 + $0x150] sm:$0xff]
        %v1715 = vld [vmem:[#allocation3 + $0x158] sm:$0xff]
        %v1716 = vld [vmem:[#allocation3 + $0x160] sm:$0xff]
        %v1717 = vld [vmem:[#allocation3 + $0x168] sm:$0xff]
        %v1718 = vld [vmem:[#allocation3 + $0x170] sm:$0xff]
        %v1719 = vld [vmem:[#allocation3 + $0x178] sm:$0xff]
        %v1720 = vld [vmem:[#allocation3 + $0x180] sm:$0xff]
        %v1721 = vld [vmem:[#allocation3 + $0x188] sm:$0xff]
        %v1722 = vld [vmem:[#allocation3 + $0x190] sm:$0xff]
        %v1723 = vld [vmem:[#allocation3 + $0x198] sm:$0xff]
        %v1724 = vld [vmem:[#allocation3 + $0x1a0] sm:$0xff]
        %v1725 = vld [vmem:[#allocation3 + $0x1a8] sm:$0xff]
        %v1726 = vld [vmem:[#allocation3 + $0x1b0] sm:$0xff]
        %v1727 = vld [vmem:[#allocation3 + $0x1b8] sm:$0xff]
        %v1728 = vld [vmem:[#allocation3 + $0x1c0] sm:$0xff]
        %v1729 = vld [vmem:[#allocation3 + $0x1c8] sm:$0xff]
        %v1730 = vld [vmem:[#allocation3 + $0x1d0] sm:$0xff]
        %v1731 = vld [vmem:[#allocation3 + $0x1d8] sm:$0xff]
        %v1732 = vld [vmem:[#allocation3 + $0x1e0] sm:$0xff]
        %v1733 = vld [vmem:[#allocation3 + $0x1e8] sm:$0xff]
        %v1734 = vld [vmem:[#allocation3 + $0x1f0] sm:$0xff]
        %v1735 = vld [vmem:[#allocation3 + $0x1f8] sm:$0xff]
        %v1736 = vld [vmem:[#allocation3 + $0x200] sm:$0xff]
        %v1737 = vld [vmem:[#allocation3 + $0x208] sm:$0xff]
        %v1738 = vld [vmem:[#allocation3 + $0x210] sm:$0xff]
        %v1739 = vld [vmem:[#allocation3 + $0x218] sm:$0xff]
        %v1740 = vld [vmem:[#allocation3 + $0x220] sm:$0xff]
        %v1741 = vld [vmem:[#allocation3 + $0x228] sm:$0xff]
        %v1742 = vld [vmem:[#allocation3 + $0x230] sm:$0xff]
        %v1743 = vld [vmem:[#allocation3 + $0x238] sm:$0xff]
        %v1744 = vld [vmem:[#allocation3 + $0x240] sm:$0xff]
        %v1745 = vld [vmem:[#allocation3 + $0x248] sm:$0xff]
        %v1746 = vld [vmem:[#allocation3 + $0x250] sm:$0xff]
        %v1747 = vld [vmem:[#allocation3 + $0x258] sm:$0xff]
        %v1748 = vld [vmem:[#allocation3 + $0x260] sm:$0xff]
        %v1749 = vld [vmem:[#allocation3 + $0x268] sm:$0xff]
        %v1750 = vld [vmem:[#allocation3 + $0x270] sm:$0xff]
        %v1751 = vld [vmem:[#allocation3 + $0x278] sm:$0xff]
        %v1752 = vld [vmem:[#allocation3 + $0x280] sm:$0xff]
        %v1753 = vld [vmem:[#allocation3 + $0x288] sm:$0xff]
        %v1754 = vld [vmem:[#allocation3 + $0x290] sm:$0xff]
        %v1755 = vld [vmem:[#allocation3 + $0x298] sm:$0xff]
        %v1756 = vld [vmem:[#allocation3 + $0x2a0] sm:$0xff]
        %v1757 = vld [vmem:[#allocation3 + $0x2a8] sm:$0xff]
        %v1758 = vld [vmem:[#allocation3 + $0x2b0] sm:$0xff]
        %v1759 = vld [vmem:[#allocation3 + $0x2b8] sm:$0xff]
        %v1760 = vld [vmem:[#allocation3 + $0x2c0] sm:$0xff]
        %v1761 = vld [vmem:[#allocation3 + $0x2c8] sm:$0xff]
        %1763 = vset.pattern.permute.xlu0 0
        %1764 = vperm.xlu0 %1763, %v1670
        %v1765 = vpop.permute.xlu0 %1764
        %1768 = vset.pattern.permute.xlu0 0
        %1769 = vperm.xlu0 %1768, %v1671
        %v1770 = vpop.permute.xlu0 %1769
        %v1778 = vunpack.c.l.b16 %v1664
        %v1779 = vunpack.c.h.b16 %v1664
        %v1780 = vunpack.c.l.b16 %v1665
        %v1781 = vunpack.c.h.b16 %v1665
        %v1782 = vunpack.c.l.b16 %v1666
        %v1783 = vunpack.c.h.b16 %v1666
        %v1784 = vunpack.c.l.b16 %v1667
        %v1785 = vunpack.c.h.b16 %v1667
        %v1786 = vunpack.c.l.b16 %v1668
        %v1787 = vunpack.c.h.b16 %v1668
        %v1788 = vunpack.c.l.b16 %v1669
        %v1789 = vunpack.c.h.b16 %v1669
        %v1790 = vpack.c.b16 %v1784, %v1778
        %v1791 = vpack.c.b16 %v1785, %v1779
        %v1792 = vpack.c.b16 %v1786, %v1780
        %v1793 = vpack.c.b16 %v1787, %v1781
        %v1794 = vpack.c.b16 %v1788, %v1782
        %v1795 = vpack.c.b16 %v1789, %v1783
        %v1891 = vunpack.c.l.b16 %v1672
        %v1892 = vunpack.c.h.b16 %v1672
        %v1893 = vunpack.c.l.b16 %v1673
        %v1894 = vunpack.c.h.b16 %v1673
        %v1895 = vunpack.c.l.b16 %v1674
        %v1896 = vunpack.c.h.b16 %v1674
        %v1897 = vunpack.c.l.b16 %v1675
        %v1898 = vunpack.c.h.b16 %v1675
        %v1899 = vunpack.c.l.b16 %v1676
        %v1900 = vunpack.c.h.b16 %v1676
        %v1901 = vunpack.c.l.b16 %v1677
        %v1902 = vunpack.c.h.b16 %v1677
        %v1903 = vunpack.c.l.b16 %v1678
        %v1904 = vunpack.c.h.b16 %v1678
        %v1905 = vunpack.c.l.b16 %v1679
        %v1906 = vunpack.c.h.b16 %v1679
        %v1907 = vunpack.c.l.b16 %v1680
        %v1908 = vunpack.c.h.b16 %v1680
        %v1909 = vunpack.c.l.b16 %v1681
        %v1910 = vunpack.c.h.b16 %v1681
        %v1911 = vunpack.c.l.b16 %v1682
        %v1912 = vunpack.c.h.b16 %v1682
        %v1913 = vunpack.c.l.b16 %v1683
        %v1914 = vunpack.c.h.b16 %v1683
        %v1915 = vunpack.c.l.b16 %v1684
        %v1916 = vunpack.c.h.b16 %v1684
        %v1917 = vunpack.c.l.b16 %v1685
        %v1918 = vunpack.c.h.b16 %v1685
        %v1919 = vunpack.c.l.b16 %v1686
        %v1920 = vunpack.c.h.b16 %v1686
        %v1921 = vunpack.c.l.b16 %v1687
        %v1922 = vunpack.c.h.b16 %v1687
        %v1923 = vunpack.c.l.b16 %v1688
        %v1924 = vunpack.c.h.b16 %v1688
        %v1925 = vunpack.c.l.b16 %v1689
        %v1926 = vunpack.c.h.b16 %v1689
        %v1927 = vunpack.c.l.b16 %v1690
        %v1928 = vunpack.c.h.b16 %v1690
        %v1929 = vunpack.c.l.b16 %v1691
        %v1930 = vunpack.c.h.b16 %v1691
        %v1931 = vunpack.c.l.b16 %v1692
        %v1932 = vunpack.c.h.b16 %v1692
        %v1933 = vunpack.c.l.b16 %v1693
        %v1934 = vunpack.c.h.b16 %v1693
        %v1935 = vunpack.c.l.b16 %v1694
        %v1936 = vunpack.c.h.b16 %v1694
        %v1937 = vunpack.c.l.b16 %v1695
        %v1938 = vunpack.c.h.b16 %v1695
        %v1939 = vunpack.c.l.b16 %v1696
        %v1940 = vunpack.c.h.b16 %v1696
        %v1941 = vunpack.c.l.b16 %v1697
        %v1942 = vunpack.c.h.b16 %v1697
        %v1943 = vunpack.c.l.b16 %v1698
        %v1944 = vunpack.c.h.b16 %v1698
        %v1945 = vunpack.c.l.b16 %v1699
        %v1946 = vunpack.c.h.b16 %v1699
        %v1947 = vunpack.c.l.b16 %v1700
        %v1948 = vunpack.c.h.b16 %v1700
        %v1949 = vunpack.c.l.b16 %v1701
        %v1950 = vunpack.c.h.b16 %v1701
        %v1951 = vunpack.c.l.b16 %v1702
        %v1952 = vunpack.c.h.b16 %v1702
        %v1953 = vunpack.c.l.b16 %v1703
        %v1954 = vunpack.c.h.b16 %v1703
        %v1955 = vunpack.c.l.b16 %v1704
        %v1956 = vunpack.c.h.b16 %v1704
        %v1957 = vunpack.c.l.b16 %v1705
        %v1958 = vunpack.c.h.b16 %v1705
        %v1959 = vunpack.c.l.b16 %v1706
        %v1960 = vunpack.c.h.b16 %v1706
        %v1961 = vunpack.c.l.b16 %v1707
        %v1962 = vunpack.c.h.b16 %v1707
        %v1963 = vunpack.c.l.b16 %v1708
        %v1964 = vunpack.c.h.b16 %v1708
        %v1965 = vunpack.c.l.b16 %v1709
        %v1966 = vunpack.c.h.b16 %v1709
        %v1967 = vunpack.c.l.b16 %v1710
        %v1968 = vunpack.c.h.b16 %v1710
        %v1969 = vunpack.c.l.b16 %v1711
        %v1970 = vunpack.c.h.b16 %v1711
        %v1971 = vunpack.c.l.b16 %v1712
        %v1972 = vunpack.c.h.b16 %v1712
        %v1973 = vunpack.c.l.b16 %v1713
        %v1974 = vunpack.c.h.b16 %v1713
        %v1975 = vunpack.c.l.b16 %v1714
        %v1976 = vunpack.c.h.b16 %v1714
        %v1977 = vunpack.c.l.b16 %v1715
        %v1978 = vunpack.c.h.b16 %v1715
        %v1979 = vunpack.c.l.b16 %v1716
        %v1980 = vunpack.c.h.b16 %v1716
        %v1981 = vunpack.c.l.b16 %v1717
        %v1982 = vunpack.c.h.b16 %v1717
        %v1983 = vunpack.c.l.b16 %v1718
        %v1984 = vunpack.c.h.b16 %v1718
        %v1985 = vunpack.c.l.b16 %v1719
        %v1986 = vunpack.c.h.b16 %v1719
        %v1987 = vunpack.c.l.b16 %v1720
        %v1988 = vunpack.c.h.b16 %v1720
        %v1989 = vunpack.c.l.b16 %v1721
        %v1990 = vunpack.c.h.b16 %v1721
        %v1991 = vunpack.c.l.b16 %v1722
        %v1992 = vunpack.c.h.b16 %v1722
        %v1993 = vunpack.c.l.b16 %v1723
        %v1994 = vunpack.c.h.b16 %v1723
        %v1995 = vunpack.c.l.b16 %v1724
        %v1996 = vunpack.c.h.b16 %v1724
        %v1997 = vunpack.c.l.b16 %v1725
        %v1998 = vunpack.c.h.b16 %v1725
        %v1999 = vunpack.c.l.b16 %v1726
        %v2000 = vunpack.c.h.b16 %v1726
        %v2001 = vunpack.c.l.b16 %v1727
        %v2002 = vunpack.c.h.b16 %v1727
        %v2003 = vunpack.c.l.b16 %v1728
        %v2004 = vunpack.c.h.b16 %v1728
        %v2005 = vunpack.c.l.b16 %v1729
        %v2006 = vunpack.c.h.b16 %v1729
        %v2007 = vunpack.c.l.b16 %v1730
        %v2008 = vunpack.c.h.b16 %v1730
        %v2009 = vunpack.c.l.b16 %v1731
        %v2010 = vunpack.c.h.b16 %v1731
        %v2011 = vunpack.c.l.b16 %v1732
        %v2012 = vunpack.c.h.b16 %v1732
        %v2013 = vunpack.c.l.b16 %v1733
        %v2014 = vunpack.c.h.b16 %v1733
        %v2015 = vunpack.c.l.b16 %v1734
        %v2016 = vunpack.c.h.b16 %v1734
        %v2017 = vunpack.c.l.b16 %v1735
        %v2018 = vunpack.c.h.b16 %v1735
        %v2019 = vunpack.c.l.b16 %v1736
        %v2020 = vunpack.c.h.b16 %v1736
        %v2021 = vunpack.c.l.b16 %v1737
        %v2022 = vunpack.c.h.b16 %v1737
        %v2023 = vunpack.c.l.b16 %v1738
        %v2024 = vunpack.c.h.b16 %v1738
        %v2025 = vunpack.c.l.b16 %v1739
        %v2026 = vunpack.c.h.b16 %v1739
        %v2027 = vunpack.c.l.b16 %v1740
        %v2028 = vunpack.c.h.b16 %v1740
        %v2029 = vunpack.c.l.b16 %v1741
        %v2030 = vunpack.c.h.b16 %v1741
        %v2031 = vunpack.c.l.b16 %v1742
        %v2032 = vunpack.c.h.b16 %v1742
        %v2033 = vunpack.c.l.b16 %v1743
        %v2034 = vunpack.c.h.b16 %v1743
        %v2035 = vunpack.c.l.b16 %v1744
        %v2036 = vunpack.c.h.b16 %v1744
        %v2037 = vunpack.c.l.b16 %v1745
        %v2038 = vunpack.c.h.b16 %v1745
        %v2039 = vunpack.c.l.b16 %v1746
        %v2040 = vunpack.c.h.b16 %v1746
        %v2041 = vunpack.c.l.b16 %v1747
        %v2042 = vunpack.c.h.b16 %v1747
        %v2043 = vunpack.c.l.b16 %v1748
        %v2044 = vunpack.c.h.b16 %v1748
        %v2045 = vunpack.c.l.b16 %v1749
        %v2046 = vunpack.c.h.b16 %v1749
        %v2047 = vunpack.c.l.b16 %v1750
        %v2048 = vunpack.c.h.b16 %v1750
        %v2049 = vunpack.c.l.b16 %v1751
        %v2050 = vunpack.c.h.b16 %v1751
        %v2051 = vunpack.c.l.b16 %v1752
        %v2052 = vunpack.c.h.b16 %v1752
        %v2053 = vunpack.c.l.b16 %v1753
        %v2054 = vunpack.c.h.b16 %v1753
        %v2055 = vunpack.c.l.b16 %v1754
        %v2056 = vunpack.c.h.b16 %v1754
        %v2057 = vunpack.c.l.b16 %v1755
        %v2058 = vunpack.c.h.b16 %v1755
        %v2059 = vunpack.c.l.b16 %v1756
        %v2060 = vunpack.c.h.b16 %v1756
        %v2061 = vunpack.c.l.b16 %v1757
        %v2062 = vunpack.c.h.b16 %v1757
        %v2063 = vunpack.c.l.b16 %v1758
        %v2064 = vunpack.c.h.b16 %v1758
        %v2065 = vunpack.c.l.b16 %v1759
        %v2066 = vunpack.c.h.b16 %v1759
        %v2067 = vunpack.c.l.b16 %v1760
        %v2068 = vunpack.c.h.b16 %v1760
        %v2069 = vunpack.c.l.b16 %v1761
        %v2070 = vunpack.c.h.b16 %v1761
        %v2071 = vpack.c.b16 %v1893, %v1891
        %v2072 = vpack.c.b16 %v1894, %v1892
        %v2073 = vpack.c.b16 %v1897, %v1895
        %v2074 = vpack.c.b16 %v1898, %v1896
        %v2075 = vpack.c.b16 %v1901, %v1899
        %v2076 = vpack.c.b16 %v1902, %v1900
        %v2077 = vpack.c.b16 %v1905, %v1903
        %v2078 = vpack.c.b16 %v1906, %v1904
        %v2079 = vpack.c.b16 %v1909, %v1907
        %v2080 = vpack.c.b16 %v1910, %v1908
        %v2081 = vpack.c.b16 %v1913, %v1911
        %v2082 = vpack.c.b16 %v1914, %v1912
        %v2083 = vpack.c.b16 %v1917, %v1915
        %v2084 = vpack.c.b16 %v1918, %v1916
        %v2085 = vpack.c.b16 %v1921, %v1919
        %v2086 = vpack.c.b16 %v1922, %v1920
        %v2087 = vpack.c.b16 %v1925, %v1923
        %v2088 = vpack.c.b16 %v1926, %v1924
        %v2089 = vpack.c.b16 %v1929, %v1927
        %v2090 = vpack.c.b16 %v1930, %v1928
        %v2091 = vpack.c.b16 %v1933, %v1931
        %v2092 = vpack.c.b16 %v1934, %v1932
        %v2093 = vpack.c.b16 %v1937, %v1935
        %v2094 = vpack.c.b16 %v1938, %v1936
        %v2095 = vpack.c.b16 %v1941, %v1939
        %v2096 = vpack.c.b16 %v1942, %v1940
        %v2097 = vpack.c.b16 %v1945, %v1943
        %v2098 = vpack.c.b16 %v1946, %v1944
        %v2099 = vpack.c.b16 %v1949, %v1947
        %v2100 = vpack.c.b16 %v1950, %v1948
        %v2101 = vpack.c.b16 %v1953, %v1951
        %v2102 = vpack.c.b16 %v1954, %v1952
        %v2103 = vpack.c.b16 %v1957, %v1955
        %v2104 = vpack.c.b16 %v1958, %v1956
        %v2105 = vpack.c.b16 %v1961, %v1959
        %v2106 = vpack.c.b16 %v1962, %v1960
        %v2107 = vpack.c.b16 %v1965, %v1963
        %v2108 = vpack.c.b16 %v1966, %v1964
        %v2109 = vpack.c.b16 %v1969, %v1967
        %v2110 = vpack.c.b16 %v1970, %v1968
        %v2111 = vpack.c.b16 %v1973, %v1971
        %v2112 = vpack.c.b16 %v1974, %v1972
        %v2113 = vpack.c.b16 %v1977, %v1975
        %v2114 = vpack.c.b16 %v1978, %v1976
        %v2115 = vpack.c.b16 %v1981, %v1979
        %v2116 = vpack.c.b16 %v1982, %v1980
        %v2117 = vpack.c.b16 %v1985, %v1983
        %v2118 = vpack.c.b16 %v1986, %v1984
        %v2119 = vpack.c.b16 %v1989, %v1987
        %v2120 = vpack.c.b16 %v1990, %v1988
        %v2121 = vpack.c.b16 %v1993, %v1991
        %v2122 = vpack.c.b16 %v1994, %v1992
        %v2123 = vpack.c.b16 %v1997, %v1995
        %v2124 = vpack.c.b16 %v1998, %v1996
        %v2125 = vpack.c.b16 %v2001, %v1999
        %v2126 = vpack.c.b16 %v2002, %v2000
        %v2127 = vpack.c.b16 %v2005, %v2003
        %v2128 = vpack.c.b16 %v2006, %v2004
        %v2129 = vpack.c.b16 %v2009, %v2007
        %v2130 = vpack.c.b16 %v2010, %v2008
        %v2131 = vpack.c.b16 %v2013, %v2011
        %v2132 = vpack.c.b16 %v2014, %v2012
        %v2133 = vpack.c.b16 %v2017, %v2015
        %v2134 = vpack.c.b16 %v2018, %v2016
        %v2135 = vpack.c.b16 %v2021, %v2019
        %v2136 = vpack.c.b16 %v2022, %v2020
        %v2137 = vpack.c.b16 %v2025, %v2023
        %v2138 = vpack.c.b16 %v2026, %v2024
        %v2139 = vpack.c.b16 %v2029, %v2027
        %v2140 = vpack.c.b16 %v2030, %v2028
        %v2141 = vpack.c.b16 %v2033, %v2031
        %v2142 = vpack.c.b16 %v2034, %v2032
        %v2143 = vpack.c.b16 %v2037, %v2035
        %v2144 = vpack.c.b16 %v2038, %v2036
        %v2145 = vpack.c.b16 %v2041, %v2039
        %v2146 = vpack.c.b16 %v2042, %v2040
        %v2147 = vpack.c.b16 %v2045, %v2043
        %v2148 = vpack.c.b16 %v2046, %v2044
        %v2149 = vpack.c.b16 %v2049, %v2047
        %v2150 = vpack.c.b16 %v2050, %v2048
        %v2151 = vpack.c.b16 %v2053, %v2051
        %v2152 = vpack.c.b16 %v2054, %v2052
        %v2153 = vpack.c.b16 %v2057, %v2055
        %v2154 = vpack.c.b16 %v2058, %v2056
        %v2155 = vpack.c.b16 %v2061, %v2059
        %v2156 = vpack.c.b16 %v2062, %v2060
        %v2157 = vpack.c.b16 %v2065, %v2063
        %v2158 = vpack.c.b16 %v2066, %v2064
        %v2159 = vpack.c.b16 %v2069, %v2067
        %v2160 = vpack.c.b16 %v2070, %v2068
        %vm2251 = vcmask 654336
        %v2253 = vsel %vm2251, %v1795, 0
        %2255 = vmatpush.bf16.msra.mxu0 %v2085
        %2256 = vmatpush.bf16.msra.mxu0 %v2083
        %2257 = vmatpush.bf16.msra.mxu0 %v2081
        %2258 = vmatpush.bf16.msra.mxu0 %v2079
        %2259 = vmatpush.bf16.msra.mxu0 %v2077
        %2260 = vmatpush.bf16.msra.mxu0 %v2075
        %2261 = vmatpush.bf16.msra.mxu0 %v2073
        %2262 = vmatpush.bf16.msra.mxu0 %v2071
        %2263 = vmatmul.bf16.gmra.mxu0 %v1790
        %v2264 = vpop.f32.mrf.mxu0
        %v2265 = vadd.f32 %v1765, %v2264
        %v2266 = vpop.f32.mrf.mxu0
        %v2267 = vadd.f32 %v1770, %v2266
        %2268 = vdwg.mxu0
        %2269 = vmatpush.bf16.msra.mxu0 %v2101
        %2270 = vmatpush.bf16.msra.mxu0 %v2099
        %2271 = vmatpush.bf16.msra.mxu0 %v2097
        %2272 = vmatpush.bf16.msra.mxu0 %v2095
        %2273 = vmatpush.bf16.msra.mxu0 %v2093
        %2274 = vmatpush.bf16.msra.mxu0 %v2091
        %2275 = vmatpush.bf16.msra.mxu0 %v2089
        %2276 = vmatpush.bf16.msra.mxu0 %v2087
        %2277 = vmatmul.bf16.gmra.mxu0 %v1791
        %v2278 = vpop.f32.mrf.mxu0
        %v2279 = vadd.f32 %v2265, %v2278
        %v2280 = vpop.f32.mrf.mxu0
        %v2281 = vadd.f32 %v2267, %v2280
        %2282 = vdwg.mxu0
        %2283 = vmatpush.bf16.msra.mxu0 %v2117
        %2284 = vmatpush.bf16.msra.mxu0 %v2115
        %2285 = vmatpush.bf16.msra.mxu0 %v2113
        %2286 = vmatpush.bf16.msra.mxu0 %v2111
        %2287 = vmatpush.bf16.msra.mxu0 %v2109
        %2288 = vmatpush.bf16.msra.mxu0 %v2107
        %2289 = vmatpush.bf16.msra.mxu0 %v2105
        %2290 = vmatpush.bf16.msra.mxu0 %v2103
        %2291 = vmatmul.bf16.gmra.mxu0 %v1792
        %v2292 = vpop.f32.mrf.mxu0
        %v2293 = vadd.f32 %v2279, %v2292
        %v2294 = vpop.f32.mrf.mxu0
        %v2295 = vadd.f32 %v2281, %v2294
        %2296 = vdwg.mxu0
        %2297 = vmatpush.bf16.msra.mxu0 %v2133
        %2298 = vmatpush.bf16.msra.mxu0 %v2131
        %2299 = vmatpush.bf16.msra.mxu0 %v2129
        %2300 = vmatpush.bf16.msra.mxu0 %v2127
        %2301 = vmatpush.bf16.msra.mxu0 %v2125
        %2302 = vmatpush.bf16.msra.mxu0 %v2123
        %2303 = vmatpush.bf16.msra.mxu0 %v2121
        %2304 = vmatpush.bf16.msra.mxu0 %v2119
        %2305 = vmatmul.bf16.gmra.mxu0 %v1793
        %v2306 = vpop.f32.mrf.mxu0
        %v2307 = vadd.f32 %v2293, %v2306
        %v2308 = vpop.f32.mrf.mxu0
        %v2309 = vadd.f32 %v2295, %v2308
        %2310 = vdwg.mxu0
        %2311 = vmatpush.bf16.msra.mxu0 %v2149
        %2312 = vmatpush.bf16.msra.mxu0 %v2147
        %2313 = vmatpush.bf16.msra.mxu0 %v2145
        %2314 = vmatpush.bf16.msra.mxu0 %v2143
        %2315 = vmatpush.bf16.msra.mxu0 %v2141
        %2316 = vmatpush.bf16.msra.mxu0 %v2139
        %2317 = vmatpush.bf16.msra.mxu0 %v2137
        %2318 = vmatpush.bf16.msra.mxu0 %v2135
        %2319 = vmatmul.bf16.gmra.mxu0 %v1794
        %v2320 = vpop.f32.mrf.mxu0
        %v2321 = vadd.f32 %v2307, %v2320
        %v2322 = vpop.f32.mrf.mxu0
        %v2323 = vadd.f32 %v2309, %v2322
        %2324 = vdwg.mxu0
        %2325 = vmatpush.bf16.msra.mxu0 0
        %2326 = vmatpush.bf16.msra.mxu0 0
        %2327 = vmatpush.bf16.msra.mxu0 0
        %2328 = vmatpush.bf16.msra.mxu0 %v2159
        %2329 = vmatpush.bf16.msra.mxu0 %v2157
        %2330 = vmatpush.bf16.msra.mxu0 %v2155
        %2331 = vmatpush.bf16.msra.mxu0 %v2153
        %2332 = vmatpush.bf16.msra.mxu0 %v2151
        %2333 = vmatmul.bf16.gmra.mxu0 %v2253
        %v2334 = vpop.f32.mrf.mxu0
        %v2335 = vadd.f32 %v2321, %v2334
        %v2336 = vpop.f32.mrf.mxu0
        %v2337 = vadd.f32 %v2323, %v2336
        %2338 = vdwg.mxu0
        %2339 = vmatpush.bf16.msra.mxu0 %v2086
        %2340 = vmatpush.bf16.msra.mxu0 %v2084
        %2341 = vmatpush.bf16.msra.mxu0 %v2082
        %2342 = vmatpush.bf16.msra.mxu0 %v2080
        %2343 = vmatpush.bf16.msra.mxu0 %v2078
        %2344 = vmatpush.bf16.msra.mxu0 %v2076
        %2345 = vmatpush.bf16.msra.mxu0 %v2074
        %2346 = vmatpush.bf16.msra.mxu0 %v2072
        %2347 = vmatmul.bf16.gmra.mxu0 %v1790
        %v2348 = vpop.f32.mrf.mxu0
        %v2349 = vadd.f32 %v1765, %v2348
        %v2350 = vpop.f32.mrf.mxu0
        %v2351 = vadd.f32 %v1770, %v2350
        %2352 = vdwg.mxu0
        %2353 = vmatpush.bf16.msra.mxu0 %v2102
        %2354 = vmatpush.bf16.msra.mxu0 %v2100
        %2355 = vmatpush.bf16.msra.mxu0 %v2098
        %2356 = vmatpush.bf16.msra.mxu0 %v2096
        %2357 = vmatpush.bf16.msra.mxu0 %v2094
        %2358 = vmatpush.bf16.msra.mxu0 %v2092
        %2359 = vmatpush.bf16.msra.mxu0 %v2090
        %2360 = vmatpush.bf16.msra.mxu0 %v2088
        %2361 = vmatmul.bf16.gmra.mxu0 %v1791
        %v2362 = vpop.f32.mrf.mxu0
        %v2363 = vadd.f32 %v2349, %v2362
        %v2364 = vpop.f32.mrf.mxu0
        %v2365 = vadd.f32 %v2351, %v2364
        %2366 = vdwg.mxu0
        %2367 = vmatpush.bf16.msra.mxu0 %v2118
        %2368 = vmatpush.bf16.msra.mxu0 %v2116
        %2369 = vmatpush.bf16.msra.mxu0 %v2114
        %2370 = vmatpush.bf16.msra.mxu0 %v2112
        %2371 = vmatpush.bf16.msra.mxu0 %v2110
        %2372 = vmatpush.bf16.msra.mxu0 %v2108
        %2373 = vmatpush.bf16.msra.mxu0 %v2106
        %2374 = vmatpush.bf16.msra.mxu0 %v2104
        %2375 = vmatmul.bf16.gmra.mxu0 %v1792
        %v2376 = vpop.f32.mrf.mxu0
        %v2377 = vadd.f32 %v2363, %v2376
        %v2378 = vpop.f32.mrf.mxu0
        %v2379 = vadd.f32 %v2365, %v2378
        %2380 = vdwg.mxu0
        %2381 = vmatpush.bf16.msra.mxu0 %v2134
        %2382 = vmatpush.bf16.msra.mxu0 %v2132
        %2383 = vmatpush.bf16.msra.mxu0 %v2130
        %2384 = vmatpush.bf16.msra.mxu0 %v2128
        %2385 = vmatpush.bf16.msra.mxu0 %v2126
        %2386 = vmatpush.bf16.msra.mxu0 %v2124
        %2387 = vmatpush.bf16.msra.mxu0 %v2122
        %2388 = vmatpush.bf16.msra.mxu0 %v2120
        %2389 = vmatmul.bf16.gmra.mxu0 %v1793
        %v2390 = vpop.f32.mrf.mxu0
        %v2391 = vadd.f32 %v2377, %v2390
        %v2392 = vpop.f32.mrf.mxu0
        %v2393 = vadd.f32 %v2379, %v2392
        %2394 = vdwg.mxu0
        %2395 = vmatpush.bf16.msra.mxu0 %v2150
        %2396 = vmatpush.bf16.msra.mxu0 %v2148
        %2397 = vmatpush.bf16.msra.mxu0 %v2146
        %2398 = vmatpush.bf16.msra.mxu0 %v2144
        %2399 = vmatpush.bf16.msra.mxu0 %v2142
        %2400 = vmatpush.bf16.msra.mxu0 %v2140
        %2401 = vmatpush.bf16.msra.mxu0 %v2138
        %2402 = vmatpush.bf16.msra.mxu0 %v2136
        %2403 = vmatmul.bf16.gmra.mxu0 %v1794
        %v2404 = vpop.f32.mrf.mxu0
        %v2405 = vadd.f32 %v2391, %v2404
        %v2406 = vpop.f32.mrf.mxu0
        %v2407 = vadd.f32 %v2393, %v2406
        %2408 = vdwg.mxu0
        %2409 = vmatpush.bf16.msra.mxu0 0
        %2410 = vmatpush.bf16.msra.mxu0 0
        %2411 = vmatpush.bf16.msra.mxu0 0
        %2412 = vmatpush.bf16.msra.mxu0 %v2160
        %2413 = vmatpush.bf16.msra.mxu0 %v2158
        %2414 = vmatpush.bf16.msra.mxu0 %v2156
        %2415 = vmatpush.bf16.msra.mxu0 %v2154
        %2416 = vmatpush.bf16.msra.mxu0 %v2152
        %2417 = vmatmul.bf16.gmra.mxu0 %v2253
        %v2418 = vpop.f32.mrf.mxu0
        %v2419 = vadd.f32 %v2405, %v2418
        %v2420 = vpop.f32.mrf.mxu0
        %v2421 = vadd.f32 %v2407, %v2420
        %2422 = vdwg.mxu0
        %2423 = vst [vmem:[%s244] sm:$0xff] %v2335
        %2424 = vst [vmem:[%s244 + $0x8] sm:$0xff] %v2419
        %2425 = vst [vmem:[%s244 + $0x10] sm:$0xff] %v2337
        %2426 = vst [vmem:[%s244 + $0x18] sm:$0xff] %v2421
        %s2427 = sand.u32 %s159, 1
        %s2428 = scalar_lea.sflag [#allocation5], %s2427
        %s2429 = sand.u32 %s159, 1
        %s2430 = smul.addr %s2429, 32
        %s2431 = scalar_lea.vmem [#allocation4], %s2430
        // Predicated region
        $region45: #{tpu_custom_call.1} parent=43 // pred_check
          %p2432 = pneg %p169
        $region46: #{tpu_custom_call.1} parent=43 // pred_check_branch
          %2434 = sbr.rel (%p2432) target = $region48
        $region47: #{tpu_custom_call.1} parent=43 // pred_region
          %2436 = vsyncadd %s2428, 0
          %s2437 = smul.addr %s20, 4
          %s2438 = smul.addr %s2437, 8
          %s2439 = scalar_lea.hbm %s6, %s2438
          %s2440 = sshll.u32 %s2431, 4
          %s2441 = int_to_ptr.vmem [resolvable:$true] %s2440
          %s2442 = sshll.u32 %s2439, 4
          %s2443 = int_to_ptr.hbm [resolvable:$true] %s2442
          %2448 = dma.vmem_to_hbm [thread:$0]  %s2441, 512, %s2443, %s2428, 256, 256, 16
        $region48: #{tpu_custom_call.1} parent=43 // pred_fallthru
          _
      $region44: #{tpu_custom_call.1} parent=5 // pred_fallthru
        _
      %p2449 = scmp.le.s32.totalorder 2, %s15
      // Predicated region
      $region49: #{tpu_custom_call.1} parent=5 // pred_check
        %p2450 = pneg %p2449
      $region50: #{tpu_custom_call.1} parent=5 // pred_check_branch
        %2452 = sbr.rel (%p2450) target = $region52
      $region51: #{tpu_custom_call.1} parent=5 // pred_region
        %s2453 = ssub.s32 %s15, 2
        // Predicated region
        $region53: #{tpu_custom_call.1} parent=51 // pred_check
          %p2454 = pneg %p175
        $region54: #{tpu_custom_call.1} parent=51 // pred_check_branch
          %2456 = sbr.rel (%p2454) target = $region56
        $region55: #{tpu_custom_call.1} parent=51 // pred_region
          %s2457 = sand.u32 %s160, 1
          %s2458 = scalar_lea.sflag [#allocation5], %s2457
          %s2459 = sand.u32 %s160, 1
          %s2460 = smul.addr %s2459, 32
          %s2461 = scalar_lea.vmem [#allocation4], %s2460
          %2463 = dma.done %s2458, 512
        $region56: #{tpu_custom_call.1} parent=51 // pred_fallthru
          _
      $region52: #{tpu_custom_call.1} parent=5 // pred_fallthru
        _
    $region6: #{tpu_custom_call.1} parent=1 // loop_footer
      %s19 = sadd.s32 1, %s15
    $region7: #{tpu_custom_call.1} parent=1 // loop_footer_branch
      %14 = sbr.rel target = $region3
    $region8: #{tpu_custom_call.1} parent=1 // loop_exit
      _
    %2464 = vsyncpa [#allocation5], 1
    %s2465 = scalar_lea.sflag [#allocation5], 1
    %2466 = vsyncpa %s2465, 1

</llo_original>
